<compile_context>
chip_gen: v7x
topology: tpu7x:2x2x1
jax: 0.10.0
libtpu: 0.0.40
codegen_flags: <defaults>
</compile_context>

<pallas_src>
import functools

import jax
import jax.numpy as jnp
import numpy as np
from jax.experimental import pallas as pl
from jax.experimental.pallas import tpu as pltpu  # noqa: F401  (TPU backend)


# ---------------------------------------------------------------------------
# Fused kernel: MHA (self-attention) + residual + FFN + residual
# ---------------------------------------------------------------------------
def _encoder_layer_kernel(x_ref, wqkv_ref, wo_ref, w1_ref, b1_ref, w2_ref, b2_ref,
                          out_ref, *, bs, seq_len, n_head, d_k, d_v):
    """Single invocation, whole batch.

    x_ref    : (bs*L, d_model)              f32
    wqkv_ref : (d_model, H*(2*d_k + d_v))   bf16   columns = [ Wq*1/sqrt(d_k) | Wk | Wv ]
    wo_ref   : (H*d_v, d_model)             bf16
    w1_ref   : (d_model, d_inner)           bf16,   b1_ref : (1, d_inner) f32
    w2_ref   : (d_inner, d_model)           bf16,   b2_ref : (1, d_model) f32
    out_ref  : (bs*L, d_model)
    """
    x = x_ref[...]                                    # (bs*L, d_model), f32 (kept for residuals)
    xb = x.astype(jnp.bfloat16)                       # bf16 MXU operand

    # ---- Fused Q|K|V projection: one dense 2-D MXU matmul, f32 accumulation ----
    qkv = jnp.dot(xb, wqkv_ref[...],
                  preferred_element_type=jnp.float32)  # (bs*L, H*(2*d_k+d_v)), f32

    hk = n_head * d_k

    # ---- Attention core: per-(batch, head) tiny (L,L) blocks, all 2-D ops ----
    per_batch = []
    for b in range(bs):
        r0, r1 = b * seq_len, (b + 1) * seq_len
        heads = []
        for h in range(n_head):
            q_h = qkv[r0:r1, h * d_k:(h + 1) * d_k]                       # (L, d_k), scale pre-folded
            k_h = qkv[r0:r1, hk + h * d_k: hk + (h + 1) * d_k]            # (L, d_k)
            v_h = qkv[r0:r1, 2 * hk + h * d_v: 2 * hk + (h + 1) * d_v]    # (L, d_v)

            s = jnp.einsum('ld,md->lm', q_h, k_h,
                           preferred_element_type=jnp.float32)            # (L, L)
            s = s - jnp.max(s, axis=-1, keepdims=True)
            p = jnp.exp(s)
            p = p * pl.reciprocal(jnp.sum(p, axis=-1, keepdims=True), approx=True)
            # attention dropout is identity in eval mode
            heads.append(jnp.dot(p, v_h,
                                 preferred_element_type=jnp.float32))     # (L, d_v)
        per_batch.append(jnp.concatenate(heads, axis=-1))                 # (L, H*d_v) lane-concat
    o_cat = jnp.concatenate(per_batch, axis=0)                            # (bs*L, H*d_v)

    # ---- Output projection: ONE 2-D matmul over lane-concatenated heads ----
    proj = jnp.dot(o_cat.astype(jnp.bfloat16), wo_ref[...],
                   preferred_element_type=jnp.float32)                    # (bs*L, d_model)
    attn_out = proj + x                                                   # residual, f32

    # ---- Position-wise FFN (consumes attn_out straight from vregs/VMEM) ----
    h1 = jnp.dot(attn_out.astype(jnp.bfloat16), w1_ref[...],
                 preferred_element_type=jnp.float32) + b1_ref[...]
    h1 = jnp.maximum(h1, 0.0)                                             # ReLU, f32
    f = jnp.dot(h1.astype(jnp.bfloat16), w2_ref[...],
                preferred_element_type=jnp.float32) + b2_ref[...]

    out_ref[...] = (f + attn_out).astype(out_ref.dtype)                   # second residual


# ---------------------------------------------------------------------------
# Wrapper
# ---------------------------------------------------------------------------
def encoder_layer(x, params, *, n_head, d_k, d_v):
    """EncoderLayer.forward: returns (enc_output, 0) — matches the PyTorch module."""
    bs, L, d_model = x.shape

    inv_temp = 1.0 / (float(d_k) ** 0.5)
    # Fold the softmax temperature into wq and fuse Q|K|V into one weight matrix
    # (free wrapper-side layout work, outside the kernel).  bf16 MXU operands.
    wqkv = jnp.concatenate(
        [params["wq"] * inv_temp, params["wk"], params["wv"]], axis=1
    ).astype(jnp.bfloat16)                                 # (d_model, H*(2*d_k+d_v))
    wo = params["wo"].astype(jnp.bfloat16)                 # (H*d_v, d_model)
    w1 = params["w1"].astype(jnp.bfloat16)                 # (d_model, d_inner)
    w2 = params["w2"].astype(jnp.bfloat16)                 # (d_inner, d_model)
    b1 = params["b1"].astype(jnp.float32)                  # (1, d_inner)
    b2 = params["b2"].astype(jnp.float32)                  # (1, d_model)

    x2d = x.reshape(bs * L, d_model)                       # 16 sublanes for every matmul

    kernel = functools.partial(_encoder_layer_kernel, bs=bs, seq_len=L,
                               n_head=n_head, d_k=d_k, d_v=d_v)

    # Single grid step (no grid): all operands live fully in VMEM, one DMA in,
    # one dense (bs*L, d_model) slab out.  No pipeline / revolving-buffer overhead.
    out2d = pl.pallas_call(
        kernel,
        out_shape=jax.ShapeDtypeStruct((bs * L, d_model), x.dtype),
    )(x2d, wqkv, wo, w1, b1, w2, b2)

    return out2d.reshape(bs, L, d_model), 0


# ---------------------------------------------------------------------------
# Pure-JAX f32 reference (module semantics, for correctness check)
# ---------------------------------------------------------------------------
def encoder_layer_ref(x, params, *, n_head, d_k, d_v):
    bs, L, d_model = x.shape
    q = (x @ params["wq"]).reshape(bs, L, n_head, d_k).transpose(0, 2, 1, 3)
    k = (x @ params["wk"]).reshape(bs, L, n_head, d_k).transpose(0, 2, 1, 3)
    v = (x @ params["wv"]).reshape(bs, L, n_head, d_v).transpose(0, 2, 1, 3)
    attn = jnp.einsum("bhqd,bhkd->bhqk", q / (d_k ** 0.5), k)
    attn = jax.nn.softmax(attn, axis=-1)
    o = jnp.einsum("bhqk,bhkd->bhqd", attn, v)
    o = o.transpose(0, 2, 1, 3).reshape(bs, L, n_head * d_v)
    o = o @ params["wo"] + x
    h = jax.nn.relu(o @ params["w1"] + params["b1"][0])
    out = h @ params["w2"] + params["b2"][0] + o
    return out


# ---------------------------------------------------------------------------
# Main
# ---------------------------------------------------------------------------
if __name__ == "__main__":
    # Small shapes consistent with the module's forward.
    bs, L = 2, 8
    d_model, d_inner = 32, 64
    n_head, d_k, d_v = 4, 8, 8

    key = jax.random.PRNGKey(0)
    keys = jax.random.split(key, 8)

    x = jax.random.normal(keys[0], (bs, L, d_model), dtype=jnp.float32)

    # Deterministic parameter init (linear weights stored as (in, out), i.e.
    # y = x @ W, equivalent to PyTorch's x @ W.T with W of shape (out, in)).
    scale = 0.1
    params = {
        "wq": scale * jax.random.normal(keys[1], (d_model, n_head * d_k), jnp.float32),
        "wk": scale * jax.random.normal(keys[2], (d_model, n_head * d_k), jnp.float32),
        "wv": scale * jax.random.normal(keys[3], (d_model, n_head * d_v), jnp.float32),
        "wo": scale * jax.random.normal(keys[4], (n_head * d_v, d_model), jnp.float32),
        "w1": scale * jax.random.normal(keys[5], (d_model, d_inner), jnp.float32),
        "b1": scale * jax.random.normal(keys[6], (1, d_inner), jnp.float32),
        "w2": scale * jax.random.normal(keys[7], (d_inner, d_model), jnp.float32),
        "b2": jnp.zeros((1, d_model), jnp.float32),
    }

    out, attn_placeholder = encoder_layer(x, params, n_head=n_head, d_k=d_k, d_v=d_v)
    out = jax.block_until_ready(out)

    ref = encoder_layer_ref(x, params, n_head=n_head, d_k=d_k, d_v=d_v)
    # Tolerance reflects bf16 MXU operands (x + all weight matrices quantized to
    # bf16, per the perf review) plus the approximate EUP reciprocal in the
    # softmax denominator, compared against an exact f32 reference.  Real
    # wiring/indexing bugs produce O(1) errors, far above this threshold.
    np.testing.assert_allclose(np.asarray(out), np.asarray(ref), rtol=3e-2, atol=3e-2)
    assert attn_placeholder == 0

    print("KERNEL_OK")
</pallas_src>

<mosaic_0001>
module attributes {stable_mosaic.version = 11 : i64} {
  func.func @_encoder_layer_kernel(%arg0: memref<16x32xf32, #tpu.memory_space<vmem>>, %arg1: memref<32x96xbf16, #tpu.memory_space<vmem>>, %arg2: memref<32x32xbf16, #tpu.memory_space<vmem>>, %arg3: memref<32x64xbf16, #tpu.memory_space<vmem>>, %arg4: memref<1x64xf32, #tpu.memory_space<vmem>>, %arg5: memref<64x32xbf16, #tpu.memory_space<vmem>>, %arg6: memref<1x32xf32, #tpu.memory_space<vmem>>, %arg7: memref<16x32xf32, #tpu.memory_space<vmem>>) attributes {dimension_semantics = [], scalar_prefetch = 0 : i64, scratch_operands = 0 : i64, tpu.core_type = #tpu.core_type<tc>} {
    %c0 = arith.constant 0 : index
    %c0_0 = arith.constant 0 : index
    %0 = vector.load %arg0[%c0, %c0_0] : memref<16x32xf32, #tpu.memory_space<vmem>>, vector<16x32xf32>
    %1 = arith.truncf %0 : vector<16x32xf32> to vector<16x32xbf16>
    %c0_1 = arith.constant 0 : index
    %c0_2 = arith.constant 0 : index
    %2 = vector.load %arg1[%c0_1, %c0_2] : memref<32x96xbf16, #tpu.memory_space<vmem>>, vector<32x96xbf16>
    %cst = arith.constant dense<0.000000e+00> : vector<16x96xf32>
    %3 = tpu.matmul %1, %2, %cst {dimension_numbers = #tpu.dot_dimension_numbers<[1], [0], [0], [1], [0, 0, 1, 1], [], []>} : vector<16x32xbf16>, vector<32x96xbf16>, vector<16x96xf32> -> vector<16x96xf32>
    %4 = vector.extract_strided_slice %3 {offsets = [0, 0], sizes = [8, 8], strides = [1, 1]} : vector<16x96xf32> to vector<8x8xf32>
    %5 = vector.extract_strided_slice %3 {offsets = [0, 32], sizes = [8, 8], strides = [1, 1]} : vector<16x96xf32> to vector<8x8xf32>
    %6 = vector.extract_strided_slice %3 {offsets = [0, 64], sizes = [8, 8], strides = [1, 1]} : vector<16x96xf32> to vector<8x8xf32>
    "tpu.trace_start"() <{level = 10 : i32, message = "ld,md->lm"}> : () -> ()
    %cst_3 = arith.constant dense<0.000000e+00> : vector<8x8xf32>
    %7 = tpu.matmul %4, %5, %cst_3 {dimension_numbers = #tpu.dot_dimension_numbers<[1], [1], [0], [0], [0, 0, 1, 0], [], []>} : vector<8x8xf32>, vector<8x8xf32>, vector<8x8xf32> -> vector<8x8xf32>
    "tpu.trace_stop"() : () -> ()
    %cst_4 = arith.constant dense<0xFF800000> : vector<8xf32>
    %8 = vector.multi_reduction <maximumf>, %7, %cst_4 [1] : vector<8x8xf32> to vector<8xf32>
    %9 = vector.shape_cast %8 : vector<8xf32> to vector<8x1xf32>
    %10 = vector.broadcast %9 : vector<8x1xf32> to vector<8x8xf32>
    %11 = arith.subf %7, %10 : vector<8x8xf32>
    %12 = math.exp %11 : vector<8x8xf32>
    %cst_5 = arith.constant dense<0.000000e+00> : vector<8xf32>
    %13 = vector.multi_reduction <add>, %12, %cst_5 [1] : vector<8x8xf32> to vector<8xf32>
    %14 = vector.shape_cast %13 : vector<8xf32> to vector<8x1xf32>
    %15 = tpu.reciprocal %14 {approx = true} : vector<8x1xf32> -> vector<8x1xf32>
    %16 = vector.broadcast %15 : vector<8x1xf32> to vector<8x8xf32>
    %17 = arith.mulf %12, %16 : vector<8x8xf32>
    %cst_6 = arith.constant dense<0.000000e+00> : vector<8x8xf32>
    %18 = tpu.matmul %17, %6, %cst_6 {dimension_numbers = #tpu.dot_dimension_numbers<[1], [0], [0], [1], [0, 0, 1, 1], [], []>} : vector<8x8xf32>, vector<8x8xf32>, vector<8x8xf32> -> vector<8x8xf32>
    %19 = vector.extract_strided_slice %3 {offsets = [0, 8], sizes = [8, 8], strides = [1, 1]} : vector<16x96xf32> to vector<8x8xf32>
    %20 = vector.extract_strided_slice %3 {offsets = [0, 40], sizes = [8, 8], strides = [1, 1]} : vector<16x96xf32> to vector<8x8xf32>
    %21 = vector.extract_strided_slice %3 {offsets = [0, 72], sizes = [8, 8], strides = [1, 1]} : vector<16x96xf32> to vector<8x8xf32>
    "tpu.trace_start"() <{level = 10 : i32, message = "ld,md->lm"}> : () -> ()
    %cst_7 = arith.constant dense<0.000000e+00> : vector<8x8xf32>
    %22 = tpu.matmul %19, %20, %cst_7 {dimension_numbers = #tpu.dot_dimension_numbers<[1], [1], [0], [0], [0, 0, 1, 0], [], []>} : vector<8x8xf32>, vector<8x8xf32>, vector<8x8xf32> -> vector<8x8xf32>
    "tpu.trace_stop"() : () -> ()
    %cst_8 = arith.constant dense<0xFF800000> : vector<8xf32>
    %23 = vector.multi_reduction <maximumf>, %22, %cst_8 [1] : vector<8x8xf32> to vector<8xf32>
    %24 = vector.shape_cast %23 : vector<8xf32> to vector<8x1xf32>
    %25 = vector.broadcast %24 : vector<8x1xf32> to vector<8x8xf32>
    %26 = arith.subf %22, %25 : vector<8x8xf32>
    %27 = math.exp %26 : vector<8x8xf32>
    %cst_9 = arith.constant dense<0.000000e+00> : vector<8xf32>
    %28 = vector.multi_reduction <add>, %27, %cst_9 [1] : vector<8x8xf32> to vector<8xf32>
    %29 = vector.shape_cast %28 : vector<8xf32> to vector<8x1xf32>
    %30 = tpu.reciprocal %29 {approx = true} : vector<8x1xf32> -> vector<8x1xf32>
    %31 = vector.broadcast %30 : vector<8x1xf32> to vector<8x8xf32>
    %32 = arith.mulf %27, %31 : vector<8x8xf32>
    %cst_10 = arith.constant dense<0.000000e+00> : vector<8x8xf32>
    %33 = tpu.matmul %32, %21, %cst_10 {dimension_numbers = #tpu.dot_dimension_numbers<[1], [0], [0], [1], [0, 0, 1, 1], [], []>} : vector<8x8xf32>, vector<8x8xf32>, vector<8x8xf32> -> vector<8x8xf32>
    %34 = vector.extract_strided_slice %3 {offsets = [0, 16], sizes = [8, 8], strides = [1, 1]} : vector<16x96xf32> to vector<8x8xf32>
    %35 = vector.extract_strided_slice %3 {offsets = [0, 48], sizes = [8, 8], strides = [1, 1]} : vector<16x96xf32> to vector<8x8xf32>
    %36 = vector.extract_strided_slice %3 {offsets = [0, 80], sizes = [8, 8], strides = [1, 1]} : vector<16x96xf32> to vector<8x8xf32>
    "tpu.trace_start"() <{level = 10 : i32, message = "ld,md->lm"}> : () -> ()
    %cst_11 = arith.constant dense<0.000000e+00> : vector<8x8xf32>
    %37 = tpu.matmul %34, %35, %cst_11 {dimension_numbers = #tpu.dot_dimension_numbers<[1], [1], [0], [0], [0, 0, 1, 0], [], []>} : vector<8x8xf32>, vector<8x8xf32>, vector<8x8xf32> -> vector<8x8xf32>
    "tpu.trace_stop"() : () -> ()
    %cst_12 = arith.constant dense<0xFF800000> : vector<8xf32>
    %38 = vector.multi_reduction <maximumf>, %37, %cst_12 [1] : vector<8x8xf32> to vector<8xf32>
    %39 = vector.shape_cast %38 : vector<8xf32> to vector<8x1xf32>
    %40 = vector.broadcast %39 : vector<8x1xf32> to vector<8x8xf32>
    %41 = arith.subf %37, %40 : vector<8x8xf32>
    %42 = math.exp %41 : vector<8x8xf32>
    %cst_13 = arith.constant dense<0.000000e+00> : vector<8xf32>
    %43 = vector.multi_reduction <add>, %42, %cst_13 [1] : vector<8x8xf32> to vector<8xf32>
    %44 = vector.shape_cast %43 : vector<8xf32> to vector<8x1xf32>
    %45 = tpu.reciprocal %44 {approx = true} : vector<8x1xf32> -> vector<8x1xf32>
    %46 = vector.broadcast %45 : vector<8x1xf32> to vector<8x8xf32>
    %47 = arith.mulf %42, %46 : vector<8x8xf32>
    %cst_14 = arith.constant dense<0.000000e+00> : vector<8x8xf32>
    %48 = tpu.matmul %47, %36, %cst_14 {dimension_numbers = #tpu.dot_dimension_numbers<[1], [0], [0], [1], [0, 0, 1, 1], [], []>} : vector<8x8xf32>, vector<8x8xf32>, vector<8x8xf32> -> vector<8x8xf32>
    %49 = vector.extract_strided_slice %3 {offsets = [0, 24], sizes = [8, 8], strides = [1, 1]} : vector<16x96xf32> to vector<8x8xf32>
    %50 = vector.extract_strided_slice %3 {offsets = [0, 56], sizes = [8, 8], strides = [1, 1]} : vector<16x96xf32> to vector<8x8xf32>
    %51 = vector.extract_strided_slice %3 {offsets = [0, 88], sizes = [8, 8], strides = [1, 1]} : vector<16x96xf32> to vector<8x8xf32>
    "tpu.trace_start"() <{level = 10 : i32, message = "ld,md->lm"}> : () -> ()
    %cst_15 = arith.constant dense<0.000000e+00> : vector<8x8xf32>
    %52 = tpu.matmul %49, %50, %cst_15 {dimension_numbers = #tpu.dot_dimension_numbers<[1], [1], [0], [0], [0, 0, 1, 0], [], []>} : vector<8x8xf32>, vector<8x8xf32>, vector<8x8xf32> -> vector<8x8xf32>
    "tpu.trace_stop"() : () -> ()
    %cst_16 = arith.constant dense<0xFF800000> : vector<8xf32>
    %53 = vector.multi_reduction <maximumf>, %52, %cst_16 [1] : vector<8x8xf32> to vector<8xf32>
    %54 = vector.shape_cast %53 : vector<8xf32> to vector<8x1xf32>
    %55 = vector.broadcast %54 : vector<8x1xf32> to vector<8x8xf32>
    %56 = arith.subf %52, %55 : vector<8x8xf32>
    %57 = math.exp %56 : vector<8x8xf32>
    %cst_17 = arith.constant dense<0.000000e+00> : vector<8xf32>
    %58 = vector.multi_reduction <add>, %57, %cst_17 [1] : vector<8x8xf32> to vector<8xf32>
    %59 = vector.shape_cast %58 : vector<8xf32> to vector<8x1xf32>
    %60 = tpu.reciprocal %59 {approx = true} : vector<8x1xf32> -> vector<8x1xf32>
    %61 = vector.broadcast %60 : vector<8x1xf32> to vector<8x8xf32>
    %62 = arith.mulf %57, %61 : vector<8x8xf32>
    %cst_18 = arith.constant dense<0.000000e+00> : vector<8x8xf32>
    %63 = tpu.matmul %62, %51, %cst_18 {dimension_numbers = #tpu.dot_dimension_numbers<[1], [0], [0], [1], [0, 0, 1, 1], [], []>} : vector<8x8xf32>, vector<8x8xf32>, vector<8x8xf32> -> vector<8x8xf32>
    %64 = tpu.concatenate %18, %33, %48, %63 in 1 : vector<8x8xf32>, vector<8x8xf32>, vector<8x8xf32>, vector<8x8xf32> -> vector<8x32xf32>
    %65 = vector.extract_strided_slice %3 {offsets = [8, 0], sizes = [8, 8], strides = [1, 1]} : vector<16x96xf32> to vector<8x8xf32>
    %66 = vector.extract_strided_slice %3 {offsets = [8, 32], sizes = [8, 8], strides = [1, 1]} : vector<16x96xf32> to vector<8x8xf32>
    %67 = vector.extract_strided_slice %3 {offsets = [8, 64], sizes = [8, 8], strides = [1, 1]} : vector<16x96xf32> to vector<8x8xf32>
    "tpu.trace_start"() <{level = 10 : i32, message = "ld,md->lm"}> : () -> ()
    %cst_19 = arith.constant dense<0.000000e+00> : vector<8x8xf32>
    %68 = tpu.matmul %65, %66, %cst_19 {dimension_numbers = #tpu.dot_dimension_numbers<[1], [1], [0], [0], [0, 0, 1, 0], [], []>} : vector<8x8xf32>, vector<8x8xf32>, vector<8x8xf32> -> vector<8x8xf32>
    "tpu.trace_stop"() : () -> ()
    %cst_20 = arith.constant dense<0xFF800000> : vector<8xf32>
    %69 = vector.multi_reduction <maximumf>, %68, %cst_20 [1] : vector<8x8xf32> to vector<8xf32>
    %70 = vector.shape_cast %69 : vector<8xf32> to vector<8x1xf32>
    %71 = vector.broadcast %70 : vector<8x1xf32> to vector<8x8xf32>
    %72 = arith.subf %68, %71 : vector<8x8xf32>
    %73 = math.exp %72 : vector<8x8xf32>
    %cst_21 = arith.constant dense<0.000000e+00> : vector<8xf32>
    %74 = vector.multi_reduction <add>, %73, %cst_21 [1] : vector<8x8xf32> to vector<8xf32>
    %75 = vector.shape_cast %74 : vector<8xf32> to vector<8x1xf32>
    %76 = tpu.reciprocal %75 {approx = true} : vector<8x1xf32> -> vector<8x1xf32>
    %77 = vector.broadcast %76 : vector<8x1xf32> to vector<8x8xf32>
    %78 = arith.mulf %73, %77 : vector<8x8xf32>
    %cst_22 = arith.constant dense<0.000000e+00> : vector<8x8xf32>
    %79 = tpu.matmul %78, %67, %cst_22 {dimension_numbers = #tpu.dot_dimension_numbers<[1], [0], [0], [1], [0, 0, 1, 1], [], []>} : vector<8x8xf32>, vector<8x8xf32>, vector<8x8xf32> -> vector<8x8xf32>
    %80 = vector.extract_strided_slice %3 {offsets = [8, 8], sizes = [8, 8], strides = [1, 1]} : vector<16x96xf32> to vector<8x8xf32>
    %81 = vector.extract_strided_slice %3 {offsets = [8, 40], sizes = [8, 8], strides = [1, 1]} : vector<16x96xf32> to vector<8x8xf32>
    %82 = vector.extract_strided_slice %3 {offsets = [8, 72], sizes = [8, 8], strides = [1, 1]} : vector<16x96xf32> to vector<8x8xf32>
    "tpu.trace_start"() <{level = 10 : i32, message = "ld,md->lm"}> : () -> ()
    %cst_23 = arith.constant dense<0.000000e+00> : vector<8x8xf32>
    %83 = tpu.matmul %80, %81, %cst_23 {dimension_numbers = #tpu.dot_dimension_numbers<[1], [1], [0], [0], [0, 0, 1, 0], [], []>} : vector<8x8xf32>, vector<8x8xf32>, vector<8x8xf32> -> vector<8x8xf32>
    "tpu.trace_stop"() : () -> ()
    %cst_24 = arith.constant dense<0xFF800000> : vector<8xf32>
    %84 = vector.multi_reduction <maximumf>, %83, %cst_24 [1] : vector<8x8xf32> to vector<8xf32>
    %85 = vector.shape_cast %84 : vector<8xf32> to vector<8x1xf32>
    %86 = vector.broadcast %85 : vector<8x1xf32> to vector<8x8xf32>
    %87 = arith.subf %83, %86 : vector<8x8xf32>
    %88 = math.exp %87 : vector<8x8xf32>
    %cst_25 = arith.constant dense<0.000000e+00> : vector<8xf32>
    %89 = vector.multi_reduction <add>, %88, %cst_25 [1] : vector<8x8xf32> to vector<8xf32>
    %90 = vector.shape_cast %89 : vector<8xf32> to vector<8x1xf32>
    %91 = tpu.reciprocal %90 {approx = true} : vector<8x1xf32> -> vector<8x1xf32>
    %92 = vector.broadcast %91 : vector<8x1xf32> to vector<8x8xf32>
    %93 = arith.mulf %88, %92 : vector<8x8xf32>
    %cst_26 = arith.constant dense<0.000000e+00> : vector<8x8xf32>
    %94 = tpu.matmul %93, %82, %cst_26 {dimension_numbers = #tpu.dot_dimension_numbers<[1], [0], [0], [1], [0, 0, 1, 1], [], []>} : vector<8x8xf32>, vector<8x8xf32>, vector<8x8xf32> -> vector<8x8xf32>
    %95 = vector.extract_strided_slice %3 {offsets = [8, 16], sizes = [8, 8], strides = [1, 1]} : vector<16x96xf32> to vector<8x8xf32>
    %96 = vector.extract_strided_slice %3 {offsets = [8, 48], sizes = [8, 8], strides = [1, 1]} : vector<16x96xf32> to vector<8x8xf32>
    %97 = vector.extract_strided_slice %3 {offsets = [8, 80], sizes = [8, 8], strides = [1, 1]} : vector<16x96xf32> to vector<8x8xf32>
    "tpu.trace_start"() <{level = 10 : i32, message = "ld,md->lm"}> : () -> ()
    %cst_27 = arith.constant dense<0.000000e+00> : vector<8x8xf32>
    %98 = tpu.matmul %95, %96, %cst_27 {dimension_numbers = #tpu.dot_dimension_numbers<[1], [1], [0], [0], [0, 0, 1, 0], [], []>} : vector<8x8xf32>, vector<8x8xf32>, vector<8x8xf32> -> vector<8x8xf32>
    "tpu.trace_stop"() : () -> ()
    %cst_28 = arith.constant dense<0xFF800000> : vector<8xf32>
    %99 = vector.multi_reduction <maximumf>, %98, %cst_28 [1] : vector<8x8xf32> to vector<8xf32>
    %100 = vector.shape_cast %99 : vector<8xf32> to vector<8x1xf32>
    %101 = vector.broadcast %100 : vector<8x1xf32> to vector<8x8xf32>
    %102 = arith.subf %98, %101 : vector<8x8xf32>
    %103 = math.exp %102 : vector<8x8xf32>
    %cst_29 = arith.constant dense<0.000000e+00> : vector<8xf32>
    %104 = vector.multi_reduction <add>, %103, %cst_29 [1] : vector<8x8xf32> to vector<8xf32>
    %105 = vector.shape_cast %104 : vector<8xf32> to vector<8x1xf32>
    %106 = tpu.reciprocal %105 {approx = true} : vector<8x1xf32> -> vector<8x1xf32>
    %107 = vector.broadcast %106 : vector<8x1xf32> to vector<8x8xf32>
    %108 = arith.mulf %103, %107 : vector<8x8xf32>
    %cst_30 = arith.constant dense<0.000000e+00> : vector<8x8xf32>
    %109 = tpu.matmul %108, %97, %cst_30 {dimension_numbers = #tpu.dot_dimension_numbers<[1], [0], [0], [1], [0, 0, 1, 1], [], []>} : vector<8x8xf32>, vector<8x8xf32>, vector<8x8xf32> -> vector<8x8xf32>
    %110 = vector.extract_strided_slice %3 {offsets = [8, 24], sizes = [8, 8], strides = [1, 1]} : vector<16x96xf32> to vector<8x8xf32>
    %111 = vector.extract_strided_slice %3 {offsets = [8, 56], sizes = [8, 8], strides = [1, 1]} : vector<16x96xf32> to vector<8x8xf32>
    %112 = vector.extract_strided_slice %3 {offsets = [8, 88], sizes = [8, 8], strides = [1, 1]} : vector<16x96xf32> to vector<8x8xf32>
    "tpu.trace_start"() <{level = 10 : i32, message = "ld,md->lm"}> : () -> ()
    %cst_31 = arith.constant dense<0.000000e+00> : vector<8x8xf32>
    %113 = tpu.matmul %110, %111, %cst_31 {dimension_numbers = #tpu.dot_dimension_numbers<[1], [1], [0], [0], [0, 0, 1, 0], [], []>} : vector<8x8xf32>, vector<8x8xf32>, vector<8x8xf32> -> vector<8x8xf32>
    "tpu.trace_stop"() : () -> ()
    %cst_32 = arith.constant dense<0xFF800000> : vector<8xf32>
    %114 = vector.multi_reduction <maximumf>, %113, %cst_32 [1] : vector<8x8xf32> to vector<8xf32>
    %115 = vector.shape_cast %114 : vector<8xf32> to vector<8x1xf32>
    %116 = vector.broadcast %115 : vector<8x1xf32> to vector<8x8xf32>
    %117 = arith.subf %113, %116 : vector<8x8xf32>
    %118 = math.exp %117 : vector<8x8xf32>
    %cst_33 = arith.constant dense<0.000000e+00> : vector<8xf32>
    %119 = vector.multi_reduction <add>, %118, %cst_33 [1] : vector<8x8xf32> to vector<8xf32>
    %120 = vector.shape_cast %119 : vector<8xf32> to vector<8x1xf32>
    %121 = tpu.reciprocal %120 {approx = true} : vector<8x1xf32> -> vector<8x1xf32>
    %122 = vector.broadcast %121 : vector<8x1xf32> to vector<8x8xf32>
    %123 = arith.mulf %118, %122 : vector<8x8xf32>
    %cst_34 = arith.constant dense<0.000000e+00> : vector<8x8xf32>
    %124 = tpu.matmul %123, %112, %cst_34 {dimension_numbers = #tpu.dot_dimension_numbers<[1], [0], [0], [1], [0, 0, 1, 1], [], []>} : vector<8x8xf32>, vector<8x8xf32>, vector<8x8xf32> -> vector<8x8xf32>
    %125 = tpu.concatenate %79, %94, %109, %124 in 1 : vector<8x8xf32>, vector<8x8xf32>, vector<8x8xf32>, vector<8x8xf32> -> vector<8x32xf32>
    %126 = tpu.concatenate %64, %125 in 0 : vector<8x32xf32>, vector<8x32xf32> -> vector<16x32xf32>
    %127 = arith.truncf %126 : vector<16x32xf32> to vector<16x32xbf16>
    %c0_35 = arith.constant 0 : index
    %c0_36 = arith.constant 0 : index
    %128 = vector.load %arg2[%c0_35, %c0_36] : memref<32x32xbf16, #tpu.memory_space<vmem>>, vector<32x32xbf16>
    %cst_37 = arith.constant dense<0.000000e+00> : vector<16x32xf32>
    %129 = tpu.matmul %127, %128, %cst_37 {dimension_numbers = #tpu.dot_dimension_numbers<[1], [0], [0], [1], [0, 0, 1, 1], [], []>} : vector<16x32xbf16>, vector<32x32xbf16>, vector<16x32xf32> -> vector<16x32xf32>
    %130 = arith.addf %129, %0 : vector<16x32xf32>
    %131 = arith.truncf %130 : vector<16x32xf32> to vector<16x32xbf16>
    %c0_38 = arith.constant 0 : index
    %c0_39 = arith.constant 0 : index
    %132 = vector.load %arg3[%c0_38, %c0_39] : memref<32x64xbf16, #tpu.memory_space<vmem>>, vector<32x64xbf16>
    %cst_40 = arith.constant dense<0.000000e+00> : vector<16x64xf32>
    %133 = tpu.matmul %131, %132, %cst_40 {dimension_numbers = #tpu.dot_dimension_numbers<[1], [0], [0], [1], [0, 0, 1, 1], [], []>} : vector<16x32xbf16>, vector<32x64xbf16>, vector<16x64xf32> -> vector<16x64xf32>
    %c0_41 = arith.constant 0 : index
    %c0_42 = arith.constant 0 : index
    %134 = vector.load %arg4[%c0_41, %c0_42] : memref<1x64xf32, #tpu.memory_space<vmem>>, vector<1x64xf32>
    %135 = vector.broadcast %134 : vector<1x64xf32> to vector<16x64xf32>
    %136 = arith.addf %133, %135 : vector<16x64xf32>
    %cst_43 = arith.constant 0.000000e+00 : f32
    %137 = vector.broadcast %cst_43 : f32 to vector<16x64xf32>
    %138 = arith.maximumf %136, %137 : vector<16x64xf32>
    %139 = arith.truncf %138 : vector<16x64xf32> to vector<16x64xbf16>
    %c0_44 = arith.constant 0 : index
    %c0_45 = arith.constant 0 : index
    %140 = vector.load %arg5[%c0_44, %c0_45] : memref<64x32xbf16, #tpu.memory_space<vmem>>, vector<64x32xbf16>
    %cst_46 = arith.constant dense<0.000000e+00> : vector<16x32xf32>
    %141 = tpu.matmul %139, %140, %cst_46 {dimension_numbers = #tpu.dot_dimension_numbers<[1], [0], [0], [1], [0, 0, 1, 1], [], []>} : vector<16x64xbf16>, vector<64x32xbf16>, vector<16x32xf32> -> vector<16x32xf32>
    %c0_47 = arith.constant 0 : index
    %c0_48 = arith.constant 0 : index
    %142 = vector.load %arg6[%c0_47, %c0_48] : memref<1x32xf32, #tpu.memory_space<vmem>>, vector<1x32xf32>
    %143 = vector.broadcast %142 : vector<1x32xf32> to vector<16x32xf32>
    %144 = arith.addf %141, %143 : vector<16x32xf32>
    %145 = arith.addf %144, %130 : vector<16x32xf32>
    %c0_49 = arith.constant 0 : index
    %c0_50 = arith.constant 0 : index
    %146 = vector.load %arg7[%c0_49, %c0_50] : memref<16x32xf32, #tpu.memory_space<vmem>>, vector<16x32xf32>
    tpu.vector_store %arg7[%c0_49, %c0_50], %145 {strides = array<i32>} : memref<16x32xf32, #tpu.memory_space<vmem>>, vector<16x32xf32>,
    return
  }
}

</mosaic_0001>

<llo_original>
// kernel: tpu_custom_call.1
$region0: #{tpu_custom_call.1}
  #allocation0 [shape = 'u32[]', space=smem, size = 0x4, offset = 0x4, fixed_abs, tag = 'smem constant byte address 0x4 - core index']
  #allocation1 [shape = 'u32[144,128]{1,0:T(1,128)}', space=vmem, size = 0x12000, scoped, tag = 'internal scratch']
  %s0 = inlined_call_operand.vmem [shape: f32[16,32], index: 0, kind: input, shape index: {}]
  %s1 = inlined_call_operand.vmem [shape: bf16[32,96], index: 1, kind: input, shape index: {}]
  %s2 = inlined_call_operand.vmem [shape: bf16[32,32], index: 2, kind: input, shape index: {}]
  %s3 = inlined_call_operand.hbm [shape: bf16[32,64], index: 3, kind: input, shape index: {}]
  %s4 = inlined_call_operand.vmem [shape: f32[1,64], index: 4, kind: input, shape index: {}]
  %s5 = inlined_call_operand.vmem [shape: bf16[64,32], index: 5, kind: input, shape index: {}]
  %s6 = inlined_call_operand.vmem [shape: f32[1,32], index: 6, kind: input, shape index: {}]
  %s7 = inlined_call_operand.hbm [shape: f32[16,32], index: 7, kind: output, shape index: {}]
  %s8 = sld [smem:[#allocation0]]
  $region42: #{tpu_custom_call.1} parent=0
    _
  %s10 = ssub.s32 1, %s8
  %s11 = scalar_select 0, %s10, %s8
  $region1: #{tpu_custom_call.1} parent=0
    #allocation2 [shape = 'u8[8192]{0}', space=vmem, size = 0x2000, scoped, tag = 'input window, operand 3, single buffered']
    #allocation3 [shape = 's32[1]{0}', space=sflag, size = 0x4, scoped, tag = 'scoped memory for tpu_custom_call.1']
    #allocation4 [shape = 's32[1]{0}', space=sflag, size = 0x4, scoped, tag = 'scoped memory for tpu_custom_call.1']
    #allocation5 [shape = 'u8[8192]{0}', space=vmem, size = 0x2000, scoped, tag = 'output window, operand 0, single buffered']
    %12 = vsyncpa [#allocation3], 0
    %13 = vsyncpa [#allocation4], 0
    // Predicated region
    $region2: #{tpu_custom_call.1} parent=1 // pred_check
      _
    $region3: #{tpu_custom_call.1} parent=1 // pred_check_branch
      %15 = sbr.rel (0) target = $region5
    $region4: #{tpu_custom_call.1} parent=1 // pred_region
      _
    $region5: #{tpu_custom_call.1} parent=1 // pred_fallthru
      _
    // Predicated region
    $region6: #{tpu_custom_call.1} parent=1 // pred_check
      _
    $region7: #{tpu_custom_call.1} parent=1 // pred_check_branch
      %17 = sbr.rel (0) target = $region9
    $region8: #{tpu_custom_call.1} parent=1 // pred_region
      _
    $region9: #{tpu_custom_call.1} parent=1 // pred_fallthru
      _
    // Predicated region
    $region10: #{tpu_custom_call.1} parent=1 // pred_check
      _
    $region11: #{tpu_custom_call.1} parent=1 // pred_check_branch
      %19 = sbr.rel (0) target = $region13
    $region12: #{tpu_custom_call.1} parent=1 // pred_region
      _
    $region13: #{tpu_custom_call.1} parent=1 // pred_fallthru
      _
    // Predicated region
    $region14: #{tpu_custom_call.1} parent=1 // pred_check
      _
    $region15: #{tpu_custom_call.1} parent=1 // pred_check_branch
      %21 = sbr.rel (0) target = $region17
    $region16: #{tpu_custom_call.1} parent=1 // pred_region
      %s23 = ssub.s32 256, 256
      %24 = vsyncadd [#allocation3], %s23
      %s25 = sshll.u32 [#allocation2], 4
      %s26 = int_to_ptr.vmem [resolvable:$true] %s25
      %31 = dma.hbm_to_vmem [thread:$0]  %s3, 256, %s26, [#allocation3], 64, 64, 4
    $region17: #{tpu_custom_call.1} parent=1 // pred_fallthru
      _
    // Predicated region
    $region18: #{tpu_custom_call.1} parent=1 // pred_check
      _
    $region19: #{tpu_custom_call.1} parent=1 // pred_check_branch
      %33 = sbr.rel (0) target = $region21
    $region20: #{tpu_custom_call.1} parent=1 // pred_region
      _
    $region21: #{tpu_custom_call.1} parent=1 // pred_fallthru
      _
    // Predicated region
    $region22: #{tpu_custom_call.1} parent=1 // pred_check
      _
    $region23: #{tpu_custom_call.1} parent=1 // pred_check_branch
      %35 = sbr.rel (0) target = $region25
    $region24: #{tpu_custom_call.1} parent=1 // pred_region
      _
    $region25: #{tpu_custom_call.1} parent=1 // pred_fallthru
      _
    // Predicated region
    $region26: #{tpu_custom_call.1} parent=1 // pred_check
      _
    $region27: #{tpu_custom_call.1} parent=1 // pred_check_branch
      %37 = sbr.rel (0) target = $region29
    $region28: #{tpu_custom_call.1} parent=1 // pred_region
      _
    $region29: #{tpu_custom_call.1} parent=1 // pred_fallthru
      _
    // Predicated region
    $region30: #{tpu_custom_call.1} parent=1 // pred_check
      _
    $region31: #{tpu_custom_call.1} parent=1 // pred_check_branch
      %39 = sbr.rel (0) target = $region33
    $region32: #{tpu_custom_call.1} parent=1 // pred_region
      %40 = dma.done [#allocation3], 256
    $region33: #{tpu_custom_call.1} parent=1 // pred_fallthru
      _
    %v42 = vld [vmem:[%s0] sm:$0xff]
    %v43 = vld [vmem:[%s0 + $0x8] sm:$0xff]
    %v44 = vpack.c.bf16 %v43, %v42
    %v45 = vld [vmem:[%s1] sm:$0xf]
    %v46 = vld [vmem:[%s1 + $0x4] sm:$0xf]
    %v47 = vld [vmem:[%s1 + $0x8] sm:$0xf]
    %v48 = vld [vmem:[%s1 + $0xc] sm:$0xf]
    %v53 = vunpack.c.l.b16 %v45
    %v54 = vunpack.c.l.b16 %v46
    %v55 = vunpack.c.l.b16 %v47
    %v56 = vunpack.c.l.b16 %v48
    %v57 = vpack.c.b16 %v54, %v53
    %v58 = vpack.c.b16 %v56, %v55
    %vm61 = vcmask 261120
    %v63 = vsel %vm61, %v44, 0
    %65 = vmatprep.subr.bf16.mxu0 0
    %66 = vmatpush1.bf16.msra.mxu0 %v57
    %67 = vmatprep.subr.bf16.mxu0 0
    %68 = vmatpush1.bf16.msra.mxu0 %v58
    %69 = vmatprep.subr.bf16.mxu0 0
    %70 = vmatpush1.bf16.msra.mxu0 0
    %71 = vmatprep.subr.bf16.mxu0 0
    %72 = vmatpush1.bf16.msra.mxu0 0
    %73 = vmatprep.subr.bf16.mxu0 0
    %74 = vmatpush1.bf16.msra.mxu0 0
    %75 = vmatprep.subr.bf16.mxu0 0
    %76 = vmatpush1.bf16.msra.mxu0 0
    %77 = vmatprep.subr.bf16.mxu0 0
    %78 = vmatpush1.bf16.msra.mxu0 0
    %79 = vmatprep.subr.bf16.mxu0 0
    %80 = vmatpush1.bf16.msra.mxu0 0
    %81 = vmatprep.subr.bf16.mxu0 0
    %82 = vmatpush1.bf16.msra.mxu0 0
    %83 = vmatprep.subr.bf16.mxu0 0
    %84 = vmatpush1.bf16.msra.mxu0 0
    %85 = vmatprep.subr.bf16.mxu0 0
    %86 = vmatpush1.bf16.msra.mxu0 0
    %87 = vmatprep.subr.bf16.mxu0 0
    %88 = vmatpush1.bf16.msra.mxu0 0
    %89 = vmatprep.subr.bf16.mxu0 0
    %90 = vmatpush1.bf16.msra.mxu0 0
    %91 = vmatprep.subr.bf16.mxu0 0
    %92 = vmatpush1.bf16.msra.mxu0 0
    %93 = vmatprep.subr.bf16.mxu0 0
    %94 = vmatpush1.bf16.msra.mxu0 0
    %95 = vmatprep.subr.bf16.mxu0 0
    %96 = vmatpush1.bf16.msra.mxu0 0
    %97 = vmatprep.mubr.bf16.mxu0 0
    %98 = vmatmul.mubr.bf16.gmra.mrb[0].mxu0 %v63
    %v99 = vpop.f32.mrb[0].mxu0
    %v100 = vadd.f32 0.0, %v99
    %v101 = vpop.f32.mrb[0].mxu0
    %v102 = vpop.f32.mrb[0].mxu0
    %v103 = vadd.f32 0.0, %v102
    %v104 = vpop.f32.mrb[0].mxu0
    %105 = vdwg.mxu0
    %107 = vrot.lane.b32.xlu0 %v100, 96
    %v108 = vpop.permute.xlu0 %107
    %vm109 = vcmask 64512
    %v110 = vsel %vm109, %v100, 0
    %v112 = vsel %vm109, %v108, 0
    %114 = vmatprep.subr.mxu0 0.0
    %115 = vmatpush1.xpose.msra.mxu0 %v112
    %116 = vmatprep.subr.mxu0 0.0
    %117 = vmatpush1.xpose.msra.mxu0 0.0
    %118 = vmatprep.subr.mxu0 0.0
    %119 = vmatpush1.xpose.msra.mxu0 0.0
    %120 = vmatprep.subr.mxu0 0.0
    %121 = vmatpush1.xpose.msra.mxu0 0.0
    %122 = vmatprep.subr.mxu0 0.0
    %123 = vmatpush1.xpose.msra.mxu0 0.0
    %124 = vmatprep.subr.mxu0 0.0
    %125 = vmatpush1.xpose.msra.mxu0 0.0
    %126 = vmatprep.subr.mxu0 0.0
    %127 = vmatpush1.xpose.msra.mxu0 0.0
    %128 = vmatprep.subr.mxu0 0.0
    %129 = vmatpush1.xpose.msra.mxu0 0.0
    %130 = vmatprep.subr.mxu0 0.0
    %131 = vmatpush1.xpose.msra.mxu0 0.0
    %132 = vmatprep.subr.mxu0 0.0
    %133 = vmatpush1.xpose.msra.mxu0 0.0
    %134 = vmatprep.subr.mxu0 0.0
    %135 = vmatpush1.xpose.msra.mxu0 0.0
    %136 = vmatprep.subr.mxu0 0.0
    %137 = vmatpush1.xpose.msra.mxu0 0.0
    %138 = vmatprep.subr.mxu0 0.0
    %139 = vmatpush1.xpose.msra.mxu0 0.0
    %140 = vmatprep.subr.mxu0 0.0
    %141 = vmatpush1.xpose.msra.mxu0 0.0
    %142 = vmatprep.subr.mxu0 0.0
    %143 = vmatpush1.xpose.msra.mxu0 0.0
    %144 = vmatprep.subr.mxu0 0.0
    %145 = vmatpush1.xpose.msra.mxu0 0.0
    %146 = vmatprep.subr.mxu0 0.0
    %147 = vmatpush1.xpose.msra.mxu0 0.0
    %148 = vmatprep.subr.mxu0 0.0
    %149 = vmatpush1.xpose.msra.mxu0 0.0
    %150 = vmatprep.subr.mxu0 0.0
    %151 = vmatpush1.xpose.msra.mxu0 0.0
    %152 = vmatprep.subr.mxu0 0.0
    %153 = vmatpush1.xpose.msra.mxu0 0.0
    %154 = vmatprep.subr.mxu0 0.0
    %155 = vmatpush1.xpose.msra.mxu0 0.0
    %156 = vmatprep.subr.mxu0 0.0
    %157 = vmatpush1.xpose.msra.mxu0 0.0
    %158 = vmatprep.subr.mxu0 0.0
    %159 = vmatpush1.xpose.msra.mxu0 0.0
    %160 = vmatprep.subr.mxu0 0.0
    %161 = vmatpush1.xpose.msra.mxu0 0.0
    %162 = vmatprep.subr.mxu0 0.0
    %163 = vmatpush1.xpose.msra.mxu0 0.0
    %164 = vmatprep.subr.mxu0 0.0
    %165 = vmatpush1.xpose.msra.mxu0 0.0
    %166 = vmatprep.subr.mxu0 0.0
    %167 = vmatpush1.xpose.msra.mxu0 0.0
    %168 = vmatprep.subr.mxu0 0.0
    %169 = vmatpush1.xpose.msra.mxu0 0.0
    %170 = vmatprep.subr.mxu0 0.0
    %171 = vmatpush1.xpose.msra.mxu0 0.0
    %172 = vmatprep.subr.mxu0 0.0
    %173 = vmatpush1.xpose.msra.mxu0 0.0
    %174 = vmatprep.subr.mxu0 0.0
    %175 = vmatpush1.xpose.msra.mxu0 0.0
    %176 = vmatprep.subr.mxu0 0.0
    %177 = vmatpush1.xpose.msra.mxu0 0.0
    %178 = vmatprep.mubr.f32.mxu0 0.0
    %179 = vmatmul.mubr.f32.gmra.mrb[0].mxu0 %v110
    %v180 = vpop.f32.mrb[0].mxu0
    %v181 = vadd.f32 0.0, %v180
    %v182 = vpop.f32.mrb[0].mxu0
    %183 = vdwg.mxu0
    %v184 = vsel %vm109, %v181, -inf
    %185 = vmax.xlane.f32.xlu0 %v184
    %v186 = vpop.xlane.xlu0 %185
    %v187 = vsub.f32 %v181, %v186
    %v188 = vmul.f32 %v187, 1.442695
    %v189 = vpow.pop %v188
    %v190 = vsel %vm109, %v189, 0.0
    %191 = vadd.xlane.f32.xlu0 %v190
    %v192 = vpop.xlane.xlu0 %191
    %v193 = vrcp.pop %v192
    %v194 = vmul.f32 %v189, %v193
    %195 = vrot.lane.b32.xlu0 %v100, 64
    %v196 = vpop.permute.xlu0 %195
    %v199 = vsel %vm109, %v194, 0
    %201 = vmatprep.subr.mxu0 0.0
    %202 = vmatpush1.msra.mxu0 %v196
    %203 = vmatprep.subr.mxu0 0.0
    %204 = vmatpush1.msra.mxu0 0.0
    %205 = vmatprep.subr.mxu0 0.0
    %206 = vmatpush1.msra.mxu0 0.0
    %207 = vmatprep.subr.mxu0 0.0
    %208 = vmatpush1.msra.mxu0 0.0
    %209 = vmatprep.subr.mxu0 0.0
    %210 = vmatpush1.msra.mxu0 0.0
    %211 = vmatprep.subr.mxu0 0.0
    %212 = vmatpush1.msra.mxu0 0.0
    %213 = vmatprep.subr.mxu0 0.0
    %214 = vmatpush1.msra.mxu0 0.0
    %215 = vmatprep.subr.mxu0 0.0
    %216 = vmatpush1.msra.mxu0 0.0
    %217 = vmatprep.subr.mxu0 0.0
    %218 = vmatpush1.msra.mxu0 0.0
    %219 = vmatprep.subr.mxu0 0.0
    %220 = vmatpush1.msra.mxu0 0.0
    %221 = vmatprep.subr.mxu0 0.0
    %222 = vmatpush1.msra.mxu0 0.0
    %223 = vmatprep.subr.mxu0 0.0
    %224 = vmatpush1.msra.mxu0 0.0
    %225 = vmatprep.subr.mxu0 0.0
    %226 = vmatpush1.msra.mxu0 0.0
    %227 = vmatprep.subr.mxu0 0.0
    %228 = vmatpush1.msra.mxu0 0.0
    %229 = vmatprep.subr.mxu0 0.0
    %230 = vmatpush1.msra.mxu0 0.0
    %231 = vmatprep.subr.mxu0 0.0
    %232 = vmatpush1.msra.mxu0 0.0
    %233 = vmatprep.subr.mxu0 0.0
    %234 = vmatpush1.msra.mxu0 0.0
    %235 = vmatprep.subr.mxu0 0.0
    %236 = vmatpush1.msra.mxu0 0.0
    %237 = vmatprep.subr.mxu0 0.0
    %238 = vmatpush1.msra.mxu0 0.0
    %239 = vmatprep.subr.mxu0 0.0
    %240 = vmatpush1.msra.mxu0 0.0
    %241 = vmatprep.subr.mxu0 0.0
    %242 = vmatpush1.msra.mxu0 0.0
    %243 = vmatprep.subr.mxu0 0.0
    %244 = vmatpush1.msra.mxu0 0.0
    %245 = vmatprep.subr.mxu0 0.0
    %246 = vmatpush1.msra.mxu0 0.0
    %247 = vmatprep.subr.mxu0 0.0
    %248 = vmatpush1.msra.mxu0 0.0
    %249 = vmatprep.subr.mxu0 0.0
    %250 = vmatpush1.msra.mxu0 0.0
    %251 = vmatprep.subr.mxu0 0.0
    %252 = vmatpush1.msra.mxu0 0.0
    %253 = vmatprep.subr.mxu0 0.0
    %254 = vmatpush1.msra.mxu0 0.0
    %255 = vmatprep.subr.mxu0 0.0
    %256 = vmatpush1.msra.mxu0 0.0
    %257 = vmatprep.subr.mxu0 0.0
    %258 = vmatpush1.msra.mxu0 0.0
    %259 = vmatprep.subr.mxu0 0.0
    %260 = vmatpush1.msra.mxu0 0.0
    %261 = vmatprep.subr.mxu0 0.0
    %262 = vmatpush1.msra.mxu0 0.0
    %263 = vmatprep.subr.mxu0 0.0
    %264 = vmatpush1.msra.mxu0 0.0
    %265 = vmatprep.mubr.f32.mxu0 0.0
    %266 = vmatmul.mubr.f32.gmra.mrb[0].mxu0 %v199
    %v267 = vpop.f32.mrb[0].mxu0
    %v268 = vadd.f32 0.0, %v267
    %v269 = vpop.f32.mrb[0].mxu0
    %270 = vdwg.mxu0
    %271 = vrot.lane.b32.xlu0 %v100, 120
    %v272 = vpop.permute.xlu0 %271
    %273 = vrot.lane.b32.xlu0 %v100, 88
    %v274 = vpop.permute.xlu0 %273
    %v275 = vsel %vm109, %v272, 0
    %v277 = vsel %vm109, %v274, 0
    %279 = vmatprep.subr.mxu0 0.0
    %280 = vmatpush1.xpose.msra.mxu0 %v277
    %281 = vmatprep.subr.mxu0 0.0
    %282 = vmatpush1.xpose.msra.mxu0 0.0
    %283 = vmatprep.subr.mxu0 0.0
    %284 = vmatpush1.xpose.msra.mxu0 0.0
    %285 = vmatprep.subr.mxu0 0.0
    %286 = vmatpush1.xpose.msra.mxu0 0.0
    %287 = vmatprep.subr.mxu0 0.0
    %288 = vmatpush1.xpose.msra.mxu0 0.0
    %289 = vmatprep.subr.mxu0 0.0
    %290 = vmatpush1.xpose.msra.mxu0 0.0
    %291 = vmatprep.subr.mxu0 0.0
    %292 = vmatpush1.xpose.msra.mxu0 0.0
    %293 = vmatprep.subr.mxu0 0.0
    %294 = vmatpush1.xpose.msra.mxu0 0.0
    %295 = vmatprep.subr.mxu0 0.0
    %296 = vmatpush1.xpose.msra.mxu0 0.0
    %297 = vmatprep.subr.mxu0 0.0
    %298 = vmatpush1.xpose.msra.mxu0 0.0
    %299 = vmatprep.subr.mxu0 0.0
    %300 = vmatpush1.xpose.msra.mxu0 0.0
    %301 = vmatprep.subr.mxu0 0.0
    %302 = vmatpush1.xpose.msra.mxu0 0.0
    %303 = vmatprep.subr.mxu0 0.0
    %304 = vmatpush1.xpose.msra.mxu0 0.0
    %305 = vmatprep.subr.mxu0 0.0
    %306 = vmatpush1.xpose.msra.mxu0 0.0
    %307 = vmatprep.subr.mxu0 0.0
    %308 = vmatpush1.xpose.msra.mxu0 0.0
    %309 = vmatprep.subr.mxu0 0.0
    %310 = vmatpush1.xpose.msra.mxu0 0.0
    %311 = vmatprep.subr.mxu0 0.0
    %312 = vmatpush1.xpose.msra.mxu0 0.0
    %313 = vmatprep.subr.mxu0 0.0
    %314 = vmatpush1.xpose.msra.mxu0 0.0
    %315 = vmatprep.subr.mxu0 0.0
    %316 = vmatpush1.xpose.msra.mxu0 0.0
    %317 = vmatprep.subr.mxu0 0.0
    %318 = vmatpush1.xpose.msra.mxu0 0.0
    %319 = vmatprep.subr.mxu0 0.0
    %320 = vmatpush1.xpose.msra.mxu0 0.0
    %321 = vmatprep.subr.mxu0 0.0
    %322 = vmatpush1.xpose.msra.mxu0 0.0
    %323 = vmatprep.subr.mxu0 0.0
    %324 = vmatpush1.xpose.msra.mxu0 0.0
    %325 = vmatprep.subr.mxu0 0.0
    %326 = vmatpush1.xpose.msra.mxu0 0.0
    %327 = vmatprep.subr.mxu0 0.0
    %328 = vmatpush1.xpose.msra.mxu0 0.0
    %329 = vmatprep.subr.mxu0 0.0
    %330 = vmatpush1.xpose.msra.mxu0 0.0
    %331 = vmatprep.subr.mxu0 0.0
    %332 = vmatpush1.xpose.msra.mxu0 0.0
    %333 = vmatprep.subr.mxu0 0.0
    %334 = vmatpush1.xpose.msra.mxu0 0.0
    %335 = vmatprep.subr.mxu0 0.0
    %336 = vmatpush1.xpose.msra.mxu0 0.0
    %337 = vmatprep.subr.mxu0 0.0
    %338 = vmatpush1.xpose.msra.mxu0 0.0
    %339 = vmatprep.subr.mxu0 0.0
    %340 = vmatpush1.xpose.msra.mxu0 0.0
    %341 = vmatprep.subr.mxu0 0.0
    %342 = vmatpush1.xpose.msra.mxu0 0.0
    %343 = vmatprep.mubr.f32.mxu0 0.0
    %344 = vmatmul.mubr.f32.gmra.mrb[0].mxu0 %v275
    %v345 = vpop.f32.mrb[0].mxu0
    %v346 = vadd.f32 0.0, %v345
    %v347 = vpop.f32.mrb[0].mxu0
    %348 = vdwg.mxu0
    %v349 = vsel %vm109, %v346, -inf
    %350 = vmax.xlane.f32.xlu0 %v349
    %v351 = vpop.xlane.xlu0 %350
    %v352 = vsub.f32 %v346, %v351
    %v353 = vmul.f32 %v352, 1.442695
    %v354 = vpow.pop %v353
    %v355 = vsel %vm109, %v354, 0.0
    %356 = vadd.xlane.f32.xlu0 %v355
    %v357 = vpop.xlane.xlu0 %356
    %v358 = vrcp.pop %v357
    %v359 = vmul.f32 %v354, %v358
    %360 = vrot.lane.b32.xlu0 %v100, 56
    %v361 = vpop.permute.xlu0 %360
    %v364 = vsel %vm109, %v359, 0
    %366 = vmatprep.subr.mxu0 0.0
    %367 = vmatpush1.msra.mxu0 %v361
    %368 = vmatprep.subr.mxu0 0.0
    %369 = vmatpush1.msra.mxu0 0.0
    %370 = vmatprep.subr.mxu0 0.0
    %371 = vmatpush1.msra.mxu0 0.0
    %372 = vmatprep.subr.mxu0 0.0
    %373 = vmatpush1.msra.mxu0 0.0
    %374 = vmatprep.subr.mxu0 0.0
    %375 = vmatpush1.msra.mxu0 0.0
    %376 = vmatprep.subr.mxu0 0.0
    %377 = vmatpush1.msra.mxu0 0.0
    %378 = vmatprep.subr.mxu0 0.0
    %379 = vmatpush1.msra.mxu0 0.0
    %380 = vmatprep.subr.mxu0 0.0
    %381 = vmatpush1.msra.mxu0 0.0
    %382 = vmatprep.subr.mxu0 0.0
    %383 = vmatpush1.msra.mxu0 0.0
    %384 = vmatprep.subr.mxu0 0.0
    %385 = vmatpush1.msra.mxu0 0.0
    %386 = vmatprep.subr.mxu0 0.0
    %387 = vmatpush1.msra.mxu0 0.0
    %388 = vmatprep.subr.mxu0 0.0
    %389 = vmatpush1.msra.mxu0 0.0
    %390 = vmatprep.subr.mxu0 0.0
    %391 = vmatpush1.msra.mxu0 0.0
    %392 = vmatprep.subr.mxu0 0.0
    %393 = vmatpush1.msra.mxu0 0.0
    %394 = vmatprep.subr.mxu0 0.0
    %395 = vmatpush1.msra.mxu0 0.0
    %396 = vmatprep.subr.mxu0 0.0
    %397 = vmatpush1.msra.mxu0 0.0
    %398 = vmatprep.subr.mxu0 0.0
    %399 = vmatpush1.msra.mxu0 0.0
    %400 = vmatprep.subr.mxu0 0.0
    %401 = vmatpush1.msra.mxu0 0.0
    %402 = vmatprep.subr.mxu0 0.0
    %403 = vmatpush1.msra.mxu0 0.0
    %404 = vmatprep.subr.mxu0 0.0
    %405 = vmatpush1.msra.mxu0 0.0
    %406 = vmatprep.subr.mxu0 0.0
    %407 = vmatpush1.msra.mxu0 0.0
    %408 = vmatprep.subr.mxu0 0.0
    %409 = vmatpush1.msra.mxu0 0.0
    %410 = vmatprep.subr.mxu0 0.0
    %411 = vmatpush1.msra.mxu0 0.0
    %412 = vmatprep.subr.mxu0 0.0
    %413 = vmatpush1.msra.mxu0 0.0
    %414 = vmatprep.subr.mxu0 0.0
    %415 = vmatpush1.msra.mxu0 0.0
    %416 = vmatprep.subr.mxu0 0.0
    %417 = vmatpush1.msra.mxu0 0.0
    %418 = vmatprep.subr.mxu0 0.0
    %419 = vmatpush1.msra.mxu0 0.0
    %420 = vmatprep.subr.mxu0 0.0
    %421 = vmatpush1.msra.mxu0 0.0
    %422 = vmatprep.subr.mxu0 0.0
    %423 = vmatpush1.msra.mxu0 0.0
    %424 = vmatprep.subr.mxu0 0.0
    %425 = vmatpush1.msra.mxu0 0.0
    %426 = vmatprep.subr.mxu0 0.0
    %427 = vmatpush1.msra.mxu0 0.0
    %428 = vmatprep.subr.mxu0 0.0
    %429 = vmatpush1.msra.mxu0 0.0
    %430 = vmatprep.mubr.f32.mxu0 0.0
    %431 = vmatmul.mubr.f32.gmra.mrb[0].mxu0 %v364
    %v432 = vpop.f32.mrb[0].mxu0
    %v433 = vadd.f32 0.0, %v432
    %v434 = vpop.f32.mrb[0].mxu0
    %435 = vdwg.mxu0
    %436 = vrot.lane.b32.xlu0 %v100, 112
    %v437 = vpop.permute.xlu0 %436
    %438 = vrot.lane.b32.xlu0 %v100, 80
    %v439 = vpop.permute.xlu0 %438
    %v440 = vsel %vm109, %v437, 0
    %v442 = vsel %vm109, %v439, 0
    %444 = vmatprep.subr.mxu0 0.0
    %445 = vmatpush1.xpose.msra.mxu0 %v442
    %446 = vmatprep.subr.mxu0 0.0
    %447 = vmatpush1.xpose.msra.mxu0 0.0
    %448 = vmatprep.subr.mxu0 0.0
    %449 = vmatpush1.xpose.msra.mxu0 0.0
    %450 = vmatprep.subr.mxu0 0.0
    %451 = vmatpush1.xpose.msra.mxu0 0.0
    %452 = vmatprep.subr.mxu0 0.0
    %453 = vmatpush1.xpose.msra.mxu0 0.0
    %454 = vmatprep.subr.mxu0 0.0
    %455 = vmatpush1.xpose.msra.mxu0 0.0
    %456 = vmatprep.subr.mxu0 0.0
    %457 = vmatpush1.xpose.msra.mxu0 0.0
    %458 = vmatprep.subr.mxu0 0.0
    %459 = vmatpush1.xpose.msra.mxu0 0.0
    %460 = vmatprep.subr.mxu0 0.0
    %461 = vmatpush1.xpose.msra.mxu0 0.0
    %462 = vmatprep.subr.mxu0 0.0
    %463 = vmatpush1.xpose.msra.mxu0 0.0
    %464 = vmatprep.subr.mxu0 0.0
    %465 = vmatpush1.xpose.msra.mxu0 0.0
    %466 = vmatprep.subr.mxu0 0.0
    %467 = vmatpush1.xpose.msra.mxu0 0.0
    %468 = vmatprep.subr.mxu0 0.0
    %469 = vmatpush1.xpose.msra.mxu0 0.0
    %470 = vmatprep.subr.mxu0 0.0
    %471 = vmatpush1.xpose.msra.mxu0 0.0
    %472 = vmatprep.subr.mxu0 0.0
    %473 = vmatpush1.xpose.msra.mxu0 0.0
    %474 = vmatprep.subr.mxu0 0.0
    %475 = vmatpush1.xpose.msra.mxu0 0.0
    %476 = vmatprep.subr.mxu0 0.0
    %477 = vmatpush1.xpose.msra.mxu0 0.0
    %478 = vmatprep.subr.mxu0 0.0
    %479 = vmatpush1.xpose.msra.mxu0 0.0
    %480 = vmatprep.subr.mxu0 0.0
    %481 = vmatpush1.xpose.msra.mxu0 0.0
    %482 = vmatprep.subr.mxu0 0.0
    %483 = vmatpush1.xpose.msra.mxu0 0.0
    %484 = vmatprep.subr.mxu0 0.0
    %485 = vmatpush1.xpose.msra.mxu0 0.0
    %486 = vmatprep.subr.mxu0 0.0
    %487 = vmatpush1.xpose.msra.mxu0 0.0
    %488 = vmatprep.subr.mxu0 0.0
    %489 = vmatpush1.xpose.msra.mxu0 0.0
    %490 = vmatprep.subr.mxu0 0.0
    %491 = vmatpush1.xpose.msra.mxu0 0.0
    %492 = vmatprep.subr.mxu0 0.0
    %493 = vmatpush1.xpose.msra.mxu0 0.0
    %494 = vmatprep.subr.mxu0 0.0
    %495 = vmatpush1.xpose.msra.mxu0 0.0
    %496 = vmatprep.subr.mxu0 0.0
    %497 = vmatpush1.xpose.msra.mxu0 0.0
    %498 = vmatprep.subr.mxu0 0.0
    %499 = vmatpush1.xpose.msra.mxu0 0.0
    %500 = vmatprep.subr.mxu0 0.0
    %501 = vmatpush1.xpose.msra.mxu0 0.0
    %502 = vmatprep.subr.mxu0 0.0
    %503 = vmatpush1.xpose.msra.mxu0 0.0
    %504 = vmatprep.subr.mxu0 0.0
    %505 = vmatpush1.xpose.msra.mxu0 0.0
    %506 = vmatprep.subr.mxu0 0.0
    %507 = vmatpush1.xpose.msra.mxu0 0.0
    %508 = vmatprep.mubr.f32.mxu0 0.0
    %509 = vmatmul.mubr.f32.gmra.mrb[0].mxu0 %v440
    %v510 = vpop.f32.mrb[0].mxu0
    %v511 = vadd.f32 0.0, %v510
    %v512 = vpop.f32.mrb[0].mxu0
    %513 = vdwg.mxu0
    %v514 = vsel %vm109, %v511, -inf
    %515 = vmax.xlane.f32.xlu0 %v514
    %v516 = vpop.xlane.xlu0 %515
    %v517 = vsub.f32 %v511, %v516
    %v518 = vmul.f32 %v517, 1.442695
    %v519 = vpow.pop %v518
    %v520 = vsel %vm109, %v519, 0.0
    %521 = vadd.xlane.f32.xlu0 %v520
    %v522 = vpop.xlane.xlu0 %521
    %v523 = vrcp.pop %v522
    %v524 = vmul.f32 %v519, %v523
    %525 = vrot.lane.b32.xlu0 %v100, 48
    %v526 = vpop.permute.xlu0 %525
    %v529 = vsel %vm109, %v524, 0
    %531 = vmatprep.subr.mxu0 0.0
    %532 = vmatpush1.msra.mxu0 %v526
    %533 = vmatprep.subr.mxu0 0.0
    %534 = vmatpush1.msra.mxu0 0.0
    %535 = vmatprep.subr.mxu0 0.0
    %536 = vmatpush1.msra.mxu0 0.0
    %537 = vmatprep.subr.mxu0 0.0
    %538 = vmatpush1.msra.mxu0 0.0
    %539 = vmatprep.subr.mxu0 0.0
    %540 = vmatpush1.msra.mxu0 0.0
    %541 = vmatprep.subr.mxu0 0.0
    %542 = vmatpush1.msra.mxu0 0.0
    %543 = vmatprep.subr.mxu0 0.0
    %544 = vmatpush1.msra.mxu0 0.0
    %545 = vmatprep.subr.mxu0 0.0
    %546 = vmatpush1.msra.mxu0 0.0
    %547 = vmatprep.subr.mxu0 0.0
    %548 = vmatpush1.msra.mxu0 0.0
    %549 = vmatprep.subr.mxu0 0.0
    %550 = vmatpush1.msra.mxu0 0.0
    %551 = vmatprep.subr.mxu0 0.0
    %552 = vmatpush1.msra.mxu0 0.0
    %553 = vmatprep.subr.mxu0 0.0
    %554 = vmatpush1.msra.mxu0 0.0
    %555 = vmatprep.subr.mxu0 0.0
    %556 = vmatpush1.msra.mxu0 0.0
    %557 = vmatprep.subr.mxu0 0.0
    %558 = vmatpush1.msra.mxu0 0.0
    %559 = vmatprep.subr.mxu0 0.0
    %560 = vmatpush1.msra.mxu0 0.0
    %561 = vmatprep.subr.mxu0 0.0
    %562 = vmatpush1.msra.mxu0 0.0
    %563 = vmatprep.subr.mxu0 0.0
    %564 = vmatpush1.msra.mxu0 0.0
    %565 = vmatprep.subr.mxu0 0.0
    %566 = vmatpush1.msra.mxu0 0.0
    %567 = vmatprep.subr.mxu0 0.0
    %568 = vmatpush1.msra.mxu0 0.0
    %569 = vmatprep.subr.mxu0 0.0
    %570 = vmatpush1.msra.mxu0 0.0
    %571 = vmatprep.subr.mxu0 0.0
    %572 = vmatpush1.msra.mxu0 0.0
    %573 = vmatprep.subr.mxu0 0.0
    %574 = vmatpush1.msra.mxu0 0.0
    %575 = vmatprep.subr.mxu0 0.0
    %576 = vmatpush1.msra.mxu0 0.0
    %577 = vmatprep.subr.mxu0 0.0
    %578 = vmatpush1.msra.mxu0 0.0
    %579 = vmatprep.subr.mxu0 0.0
    %580 = vmatpush1.msra.mxu0 0.0
    %581 = vmatprep.subr.mxu0 0.0
    %582 = vmatpush1.msra.mxu0 0.0
    %583 = vmatprep.subr.mxu0 0.0
    %584 = vmatpush1.msra.mxu0 0.0
    %585 = vmatprep.subr.mxu0 0.0
    %586 = vmatpush1.msra.mxu0 0.0
    %587 = vmatprep.subr.mxu0 0.0
    %588 = vmatpush1.msra.mxu0 0.0
    %589 = vmatprep.subr.mxu0 0.0
    %590 = vmatpush1.msra.mxu0 0.0
    %591 = vmatprep.subr.mxu0 0.0
    %592 = vmatpush1.msra.mxu0 0.0
    %593 = vmatprep.subr.mxu0 0.0
    %594 = vmatpush1.msra.mxu0 0.0
    %595 = vmatprep.mubr.f32.mxu0 0.0
    %596 = vmatmul.mubr.f32.gmra.mrb[0].mxu0 %v529
    %v597 = vpop.f32.mrb[0].mxu0
    %v598 = vadd.f32 0.0, %v597
    %v599 = vpop.f32.mrb[0].mxu0
    %600 = vdwg.mxu0
    %601 = vrot.lane.b32.xlu0 %v100, 104
    %v602 = vpop.permute.xlu0 %601
    %603 = vrot.lane.b32.xlu0 %v100, 72
    %v604 = vpop.permute.xlu0 %603
    %v605 = vsel %vm109, %v602, 0
    %v607 = vsel %vm109, %v604, 0
    %609 = vmatprep.subr.mxu0 0.0
    %610 = vmatpush1.xpose.msra.mxu0 %v607
    %611 = vmatprep.subr.mxu0 0.0
    %612 = vmatpush1.xpose.msra.mxu0 0.0
    %613 = vmatprep.subr.mxu0 0.0
    %614 = vmatpush1.xpose.msra.mxu0 0.0
    %615 = vmatprep.subr.mxu0 0.0
    %616 = vmatpush1.xpose.msra.mxu0 0.0
    %617 = vmatprep.subr.mxu0 0.0
    %618 = vmatpush1.xpose.msra.mxu0 0.0
    %619 = vmatprep.subr.mxu0 0.0
    %620 = vmatpush1.xpose.msra.mxu0 0.0
    %621 = vmatprep.subr.mxu0 0.0
    %622 = vmatpush1.xpose.msra.mxu0 0.0
    %623 = vmatprep.subr.mxu0 0.0
    %624 = vmatpush1.xpose.msra.mxu0 0.0
    %625 = vmatprep.subr.mxu0 0.0
    %626 = vmatpush1.xpose.msra.mxu0 0.0
    %627 = vmatprep.subr.mxu0 0.0
    %628 = vmatpush1.xpose.msra.mxu0 0.0
    %629 = vmatprep.subr.mxu0 0.0
    %630 = vmatpush1.xpose.msra.mxu0 0.0
    %631 = vmatprep.subr.mxu0 0.0
    %632 = vmatpush1.xpose.msra.mxu0 0.0
    %633 = vmatprep.subr.mxu0 0.0
    %634 = vmatpush1.xpose.msra.mxu0 0.0
    %635 = vmatprep.subr.mxu0 0.0
    %636 = vmatpush1.xpose.msra.mxu0 0.0
    %637 = vmatprep.subr.mxu0 0.0
    %638 = vmatpush1.xpose.msra.mxu0 0.0
    %639 = vmatprep.subr.mxu0 0.0
    %640 = vmatpush1.xpose.msra.mxu0 0.0
    %641 = vmatprep.subr.mxu0 0.0
    %642 = vmatpush1.xpose.msra.mxu0 0.0
    %643 = vmatprep.subr.mxu0 0.0
    %644 = vmatpush1.xpose.msra.mxu0 0.0
    %645 = vmatprep.subr.mxu0 0.0
    %646 = vmatpush1.xpose.msra.mxu0 0.0
    %647 = vmatprep.subr.mxu0 0.0
    %648 = vmatpush1.xpose.msra.mxu0 0.0
    %649 = vmatprep.subr.mxu0 0.0
    %650 = vmatpush1.xpose.msra.mxu0 0.0
    %651 = vmatprep.subr.mxu0 0.0
    %652 = vmatpush1.xpose.msra.mxu0 0.0
    %653 = vmatprep.subr.mxu0 0.0
    %654 = vmatpush1.xpose.msra.mxu0 0.0
    %655 = vmatprep.subr.mxu0 0.0
    %656 = vmatpush1.xpose.msra.mxu0 0.0
    %657 = vmatprep.subr.mxu0 0.0
    %658 = vmatpush1.xpose.msra.mxu0 0.0
    %659 = vmatprep.subr.mxu0 0.0
    %660 = vmatpush1.xpose.msra.mxu0 0.0
    %661 = vmatprep.subr.mxu0 0.0
    %662 = vmatpush1.xpose.msra.mxu0 0.0
    %663 = vmatprep.subr.mxu0 0.0
    %664 = vmatpush1.xpose.msra.mxu0 0.0
    %665 = vmatprep.subr.mxu0 0.0
    %666 = vmatpush1.xpose.msra.mxu0 0.0
    %667 = vmatprep.subr.mxu0 0.0
    %668 = vmatpush1.xpose.msra.mxu0 0.0
    %669 = vmatprep.subr.mxu0 0.0
    %670 = vmatpush1.xpose.msra.mxu0 0.0
    %671 = vmatprep.subr.mxu0 0.0
    %672 = vmatpush1.xpose.msra.mxu0 0.0
    %673 = vmatprep.mubr.f32.mxu0 0.0
    %674 = vmatmul.mubr.f32.gmra.mrb[0].mxu0 %v605
    %v675 = vpop.f32.mrb[0].mxu0
    %v676 = vadd.f32 0.0, %v675
    %v677 = vpop.f32.mrb[0].mxu0
    %678 = vdwg.mxu0
    %v679 = vsel %vm109, %v676, -inf
    %680 = vmax.xlane.f32.xlu0 %v679
    %v681 = vpop.xlane.xlu0 %680
    %v682 = vsub.f32 %v676, %v681
    %v683 = vmul.f32 %v682, 1.442695
    %v684 = vpow.pop %v683
    %v685 = vsel %vm109, %v684, 0.0
    %686 = vadd.xlane.f32.xlu0 %v685
    %v687 = vpop.xlane.xlu0 %686
    %v688 = vrcp.pop %v687
    %v689 = vmul.f32 %v684, %v688
    %690 = vrot.lane.b32.xlu0 %v100, 40
    %v691 = vpop.permute.xlu0 %690
    %v694 = vsel %vm109, %v689, 0
    %696 = vmatprep.subr.mxu0 0.0
    %697 = vmatpush1.msra.mxu0 %v691
    %698 = vmatprep.subr.mxu0 0.0
    %699 = vmatpush1.msra.mxu0 0.0
    %700 = vmatprep.subr.mxu0 0.0
    %701 = vmatpush1.msra.mxu0 0.0
    %702 = vmatprep.subr.mxu0 0.0
    %703 = vmatpush1.msra.mxu0 0.0
    %704 = vmatprep.subr.mxu0 0.0
    %705 = vmatpush1.msra.mxu0 0.0
    %706 = vmatprep.subr.mxu0 0.0
    %707 = vmatpush1.msra.mxu0 0.0
    %708 = vmatprep.subr.mxu0 0.0
    %709 = vmatpush1.msra.mxu0 0.0
    %710 = vmatprep.subr.mxu0 0.0
    %711 = vmatpush1.msra.mxu0 0.0
    %712 = vmatprep.subr.mxu0 0.0
    %713 = vmatpush1.msra.mxu0 0.0
    %714 = vmatprep.subr.mxu0 0.0
    %715 = vmatpush1.msra.mxu0 0.0
    %716 = vmatprep.subr.mxu0 0.0
    %717 = vmatpush1.msra.mxu0 0.0
    %718 = vmatprep.subr.mxu0 0.0
    %719 = vmatpush1.msra.mxu0 0.0
    %720 = vmatprep.subr.mxu0 0.0
    %721 = vmatpush1.msra.mxu0 0.0
    %722 = vmatprep.subr.mxu0 0.0
    %723 = vmatpush1.msra.mxu0 0.0
    %724 = vmatprep.subr.mxu0 0.0
    %725 = vmatpush1.msra.mxu0 0.0
    %726 = vmatprep.subr.mxu0 0.0
    %727 = vmatpush1.msra.mxu0 0.0
    %728 = vmatprep.subr.mxu0 0.0
    %729 = vmatpush1.msra.mxu0 0.0
    %730 = vmatprep.subr.mxu0 0.0
    %731 = vmatpush1.msra.mxu0 0.0
    %732 = vmatprep.subr.mxu0 0.0
    %733 = vmatpush1.msra.mxu0 0.0
    %734 = vmatprep.subr.mxu0 0.0
    %735 = vmatpush1.msra.mxu0 0.0
    %736 = vmatprep.subr.mxu0 0.0
    %737 = vmatpush1.msra.mxu0 0.0
    %738 = vmatprep.subr.mxu0 0.0
    %739 = vmatpush1.msra.mxu0 0.0
    %740 = vmatprep.subr.mxu0 0.0
    %741 = vmatpush1.msra.mxu0 0.0
    %742 = vmatprep.subr.mxu0 0.0
    %743 = vmatpush1.msra.mxu0 0.0
    %744 = vmatprep.subr.mxu0 0.0
    %745 = vmatpush1.msra.mxu0 0.0
    %746 = vmatprep.subr.mxu0 0.0
    %747 = vmatpush1.msra.mxu0 0.0
    %748 = vmatprep.subr.mxu0 0.0
    %749 = vmatpush1.msra.mxu0 0.0
    %750 = vmatprep.subr.mxu0 0.0
    %751 = vmatpush1.msra.mxu0 0.0
    %752 = vmatprep.subr.mxu0 0.0
    %753 = vmatpush1.msra.mxu0 0.0
    %754 = vmatprep.subr.mxu0 0.0
    %755 = vmatpush1.msra.mxu0 0.0
    %756 = vmatprep.subr.mxu0 0.0
    %757 = vmatpush1.msra.mxu0 0.0
    %758 = vmatprep.subr.mxu0 0.0
    %759 = vmatpush1.msra.mxu0 0.0
    %760 = vmatprep.mubr.f32.mxu0 0.0
    %761 = vmatmul.mubr.f32.gmra.mrb[0].mxu0 %v694
    %v762 = vpop.f32.mrb[0].mxu0
    %v763 = vadd.f32 0.0, %v762
    %v764 = vpop.f32.mrb[0].mxu0
    %765 = vdwg.mxu0
    %767 = vrot.lane.b32.xlu0 %v433, 8
    %v768 = vpop.permute.xlu0 %767
    %771 = vrot.lane.b32.xlu0 %v598, 16
    %v772 = vpop.permute.xlu0 %771
    %775 = vrot.lane.b32.xlu0 %v763, 24
    %v776 = vpop.permute.xlu0 %775
    %v778 = vsel %vm109, %v268, %v768
    %vm779 = vcmask 130048
    %v780 = vsel %vm779, %v778, %v772
    %vm781 = vcmask 195584
    %v782 = vsel %vm781, %v780, %v776
    %784 = vrot.lane.b32.xlu0 %v103, 96
    %v785 = vpop.permute.xlu0 %784
    %v786 = vsel %vm109, %v103, 0
    %v788 = vsel %vm109, %v785, 0
    %790 = vmatprep.subr.mxu0 0.0
    %791 = vmatpush1.xpose.msra.mxu0 %v788
    %792 = vmatprep.subr.mxu0 0.0
    %793 = vmatpush1.xpose.msra.mxu0 0.0
    %794 = vmatprep.subr.mxu0 0.0
    %795 = vmatpush1.xpose.msra.mxu0 0.0
    %796 = vmatprep.subr.mxu0 0.0
    %797 = vmatpush1.xpose.msra.mxu0 0.0
    %798 = vmatprep.subr.mxu0 0.0
    %799 = vmatpush1.xpose.msra.mxu0 0.0
    %800 = vmatprep.subr.mxu0 0.0
    %801 = vmatpush1.xpose.msra.mxu0 0.0
    %802 = vmatprep.subr.mxu0 0.0
    %803 = vmatpush1.xpose.msra.mxu0 0.0
    %804 = vmatprep.subr.mxu0 0.0
    %805 = vmatpush1.xpose.msra.mxu0 0.0
    %806 = vmatprep.subr.mxu0 0.0
    %807 = vmatpush1.xpose.msra.mxu0 0.0
    %808 = vmatprep.subr.mxu0 0.0
    %809 = vmatpush1.xpose.msra.mxu0 0.0
    %810 = vmatprep.subr.mxu0 0.0
    %811 = vmatpush1.xpose.msra.mxu0 0.0
    %812 = vmatprep.subr.mxu0 0.0
    %813 = vmatpush1.xpose.msra.mxu0 0.0
    %814 = vmatprep.subr.mxu0 0.0
    %815 = vmatpush1.xpose.msra.mxu0 0.0
    %816 = vmatprep.subr.mxu0 0.0
    %817 = vmatpush1.xpose.msra.mxu0 0.0
    %818 = vmatprep.subr.mxu0 0.0
    %819 = vmatpush1.xpose.msra.mxu0 0.0
    %820 = vmatprep.subr.mxu0 0.0
    %821 = vmatpush1.xpose.msra.mxu0 0.0
    %822 = vmatprep.subr.mxu0 0.0
    %823 = vmatpush1.xpose.msra.mxu0 0.0
    %824 = vmatprep.subr.mxu0 0.0
    %825 = vmatpush1.xpose.msra.mxu0 0.0
    %826 = vmatprep.subr.mxu0 0.0
    %827 = vmatpush1.xpose.msra.mxu0 0.0
    %828 = vmatprep.subr.mxu0 0.0
    %829 = vmatpush1.xpose.msra.mxu0 0.0
    %830 = vmatprep.subr.mxu0 0.0
    %831 = vmatpush1.xpose.msra.mxu0 0.0
    %832 = vmatprep.subr.mxu0 0.0
    %833 = vmatpush1.xpose.msra.mxu0 0.0
    %834 = vmatprep.subr.mxu0 0.0
    %835 = vmatpush1.xpose.msra.mxu0 0.0
    %836 = vmatprep.subr.mxu0 0.0
    %837 = vmatpush1.xpose.msra.mxu0 0.0
    %838 = vmatprep.subr.mxu0 0.0
    %839 = vmatpush1.xpose.msra.mxu0 0.0
    %840 = vmatprep.subr.mxu0 0.0
    %841 = vmatpush1.xpose.msra.mxu0 0.0
    %842 = vmatprep.subr.mxu0 0.0
    %843 = vmatpush1.xpose.msra.mxu0 0.0
    %844 = vmatprep.subr.mxu0 0.0
    %845 = vmatpush1.xpose.msra.mxu0 0.0
    %846 = vmatprep.subr.mxu0 0.0
    %847 = vmatpush1.xpose.msra.mxu0 0.0
    %848 = vmatprep.subr.mxu0 0.0
    %849 = vmatpush1.xpose.msra.mxu0 0.0
    %850 = vmatprep.subr.mxu0 0.0
    %851 = vmatpush1.xpose.msra.mxu0 0.0
    %852 = vmatprep.subr.mxu0 0.0
    %853 = vmatpush1.xpose.msra.mxu0 0.0
    %854 = vmatprep.mubr.f32.mxu0 0.0
    %855 = vmatmul.mubr.f32.gmra.mrb[0].mxu0 %v786
    %v856 = vpop.f32.mrb[0].mxu0
    %v857 = vadd.f32 0.0, %v856
    %v858 = vpop.f32.mrb[0].mxu0
    %859 = vdwg.mxu0
    %v860 = vsel %vm109, %v857, -inf
    %861 = vmax.xlane.f32.xlu0 %v860
    %v862 = vpop.xlane.xlu0 %861
    %v863 = vsub.f32 %v857, %v862
    %v864 = vmul.f32 %v863, 1.442695
    %v865 = vpow.pop %v864
    %v866 = vsel %vm109, %v865, 0.0
    %867 = vadd.xlane.f32.xlu0 %v866
    %v868 = vpop.xlane.xlu0 %867
    %v869 = vrcp.pop %v868
    %v870 = vmul.f32 %v865, %v869
    %871 = vrot.lane.b32.xlu0 %v103, 64
    %v872 = vpop.permute.xlu0 %871
    %v875 = vsel %vm109, %v870, 0
    %877 = vmatprep.subr.mxu0 0.0
    %878 = vmatpush1.msra.mxu0 %v872
    %879 = vmatprep.subr.mxu0 0.0
    %880 = vmatpush1.msra.mxu0 0.0
    %881 = vmatprep.subr.mxu0 0.0
    %882 = vmatpush1.msra.mxu0 0.0
    %883 = vmatprep.subr.mxu0 0.0
    %884 = vmatpush1.msra.mxu0 0.0
    %885 = vmatprep.subr.mxu0 0.0
    %886 = vmatpush1.msra.mxu0 0.0
    %887 = vmatprep.subr.mxu0 0.0
    %888 = vmatpush1.msra.mxu0 0.0
    %889 = vmatprep.subr.mxu0 0.0
    %890 = vmatpush1.msra.mxu0 0.0
    %891 = vmatprep.subr.mxu0 0.0
    %892 = vmatpush1.msra.mxu0 0.0
    %893 = vmatprep.subr.mxu0 0.0
    %894 = vmatpush1.msra.mxu0 0.0
    %895 = vmatprep.subr.mxu0 0.0
    %896 = vmatpush1.msra.mxu0 0.0
    %897 = vmatprep.subr.mxu0 0.0
    %898 = vmatpush1.msra.mxu0 0.0
    %899 = vmatprep.subr.mxu0 0.0
    %900 = vmatpush1.msra.mxu0 0.0
    %901 = vmatprep.subr.mxu0 0.0
    %902 = vmatpush1.msra.mxu0 0.0
    %903 = vmatprep.subr.mxu0 0.0
    %904 = vmatpush1.msra.mxu0 0.0
    %905 = vmatprep.subr.mxu0 0.0
    %906 = vmatpush1.msra.mxu0 0.0
    %907 = vmatprep.subr.mxu0 0.0
    %908 = vmatpush1.msra.mxu0 0.0
    %909 = vmatprep.subr.mxu0 0.0
    %910 = vmatpush1.msra.mxu0 0.0
    %911 = vmatprep.subr.mxu0 0.0
    %912 = vmatpush1.msra.mxu0 0.0
    %913 = vmatprep.subr.mxu0 0.0
    %914 = vmatpush1.msra.mxu0 0.0
    %915 = vmatprep.subr.mxu0 0.0
    %916 = vmatpush1.msra.mxu0 0.0
    %917 = vmatprep.subr.mxu0 0.0
    %918 = vmatpush1.msra.mxu0 0.0
    %919 = vmatprep.subr.mxu0 0.0
    %920 = vmatpush1.msra.mxu0 0.0
    %921 = vmatprep.subr.mxu0 0.0
    %922 = vmatpush1.msra.mxu0 0.0
    %923 = vmatprep.subr.mxu0 0.0
    %924 = vmatpush1.msra.mxu0 0.0
    %925 = vmatprep.subr.mxu0 0.0
    %926 = vmatpush1.msra.mxu0 0.0
    %927 = vmatprep.subr.mxu0 0.0
    %928 = vmatpush1.msra.mxu0 0.0
    %929 = vmatprep.subr.mxu0 0.0
    %930 = vmatpush1.msra.mxu0 0.0
    %931 = vmatprep.subr.mxu0 0.0
    %932 = vmatpush1.msra.mxu0 0.0
    %933 = vmatprep.subr.mxu0 0.0
    %934 = vmatpush1.msra.mxu0 0.0
    %935 = vmatprep.subr.mxu0 0.0
    %936 = vmatpush1.msra.mxu0 0.0
    %937 = vmatprep.subr.mxu0 0.0
    %938 = vmatpush1.msra.mxu0 0.0
    %939 = vmatprep.subr.mxu0 0.0
    %940 = vmatpush1.msra.mxu0 0.0
    %941 = vmatprep.mubr.f32.mxu0 0.0
    %942 = vmatmul.mubr.f32.gmra.mrb[0].mxu0 %v875
    %v943 = vpop.f32.mrb[0].mxu0
    %v944 = vadd.f32 0.0, %v943
    %v945 = vpop.f32.mrb[0].mxu0
    %946 = vdwg.mxu0
    %947 = vrot.lane.b32.xlu0 %v103, 120
    %v948 = vpop.permute.xlu0 %947
    %949 = vrot.lane.b32.xlu0 %v103, 88
    %v950 = vpop.permute.xlu0 %949
    %v951 = vsel %vm109, %v948, 0
    %v953 = vsel %vm109, %v950, 0
    %955 = vmatprep.subr.mxu0 0.0
    %956 = vmatpush1.xpose.msra.mxu0 %v953
    %957 = vmatprep.subr.mxu0 0.0
    %958 = vmatpush1.xpose.msra.mxu0 0.0
    %959 = vmatprep.subr.mxu0 0.0
    %960 = vmatpush1.xpose.msra.mxu0 0.0
    %961 = vmatprep.subr.mxu0 0.0
    %962 = vmatpush1.xpose.msra.mxu0 0.0
    %963 = vmatprep.subr.mxu0 0.0
    %964 = vmatpush1.xpose.msra.mxu0 0.0
    %965 = vmatprep.subr.mxu0 0.0
    %966 = vmatpush1.xpose.msra.mxu0 0.0
    %967 = vmatprep.subr.mxu0 0.0
    %968 = vmatpush1.xpose.msra.mxu0 0.0
    %969 = vmatprep.subr.mxu0 0.0
    %970 = vmatpush1.xpose.msra.mxu0 0.0
    %971 = vmatprep.subr.mxu0 0.0
    %972 = vmatpush1.xpose.msra.mxu0 0.0
    %973 = vmatprep.subr.mxu0 0.0
    %974 = vmatpush1.xpose.msra.mxu0 0.0
    %975 = vmatprep.subr.mxu0 0.0
    %976 = vmatpush1.xpose.msra.mxu0 0.0
    %977 = vmatprep.subr.mxu0 0.0
    %978 = vmatpush1.xpose.msra.mxu0 0.0
    %979 = vmatprep.subr.mxu0 0.0
    %980 = vmatpush1.xpose.msra.mxu0 0.0
    %981 = vmatprep.subr.mxu0 0.0
    %982 = vmatpush1.xpose.msra.mxu0 0.0
    %983 = vmatprep.subr.mxu0 0.0
    %984 = vmatpush1.xpose.msra.mxu0 0.0
    %985 = vmatprep.subr.mxu0 0.0
    %986 = vmatpush1.xpose.msra.mxu0 0.0
    %987 = vmatprep.subr.mxu0 0.0
    %988 = vmatpush1.xpose.msra.mxu0 0.0
    %989 = vmatprep.subr.mxu0 0.0
    %990 = vmatpush1.xpose.msra.mxu0 0.0
    %991 = vmatprep.subr.mxu0 0.0
    %992 = vmatpush1.xpose.msra.mxu0 0.0
    %993 = vmatprep.subr.mxu0 0.0
    %994 = vmatpush1.xpose.msra.mxu0 0.0
    %995 = vmatprep.subr.mxu0 0.0
    %996 = vmatpush1.xpose.msra.mxu0 0.0
    %997 = vmatprep.subr.mxu0 0.0
    %998 = vmatpush1.xpose.msra.mxu0 0.0
    %999 = vmatprep.subr.mxu0 0.0
    %1000 = vmatpush1.xpose.msra.mxu0 0.0
    %1001 = vmatprep.subr.mxu0 0.0
    %1002 = vmatpush1.xpose.msra.mxu0 0.0
    %1003 = vmatprep.subr.mxu0 0.0
    %1004 = vmatpush1.xpose.msra.mxu0 0.0
    %1005 = vmatprep.subr.mxu0 0.0
    %1006 = vmatpush1.xpose.msra.mxu0 0.0
    %1007 = vmatprep.subr.mxu0 0.0
    %1008 = vmatpush1.xpose.msra.mxu0 0.0
    %1009 = vmatprep.subr.mxu0 0.0
    %1010 = vmatpush1.xpose.msra.mxu0 0.0
    %1011 = vmatprep.subr.mxu0 0.0
    %1012 = vmatpush1.xpose.msra.mxu0 0.0
    %1013 = vmatprep.subr.mxu0 0.0
    %1014 = vmatpush1.xpose.msra.mxu0 0.0
    %1015 = vmatprep.subr.mxu0 0.0
    %1016 = vmatpush1.xpose.msra.mxu0 0.0
    %1017 = vmatprep.subr.mxu0 0.0
    %1018 = vmatpush1.xpose.msra.mxu0 0.0
    %1019 = vmatprep.mubr.f32.mxu0 0.0
    %1020 = vmatmul.mubr.f32.gmra.mrb[0].mxu0 %v951
    %v1021 = vpop.f32.mrb[0].mxu0
    %v1022 = vadd.f32 0.0, %v1021
    %v1023 = vpop.f32.mrb[0].mxu0
    %1024 = vdwg.mxu0
    %v1025 = vsel %vm109, %v1022, -inf
    %1026 = vmax.xlane.f32.xlu0 %v1025
    %v1027 = vpop.xlane.xlu0 %1026
    %v1028 = vsub.f32 %v1022, %v1027
    %v1029 = vmul.f32 %v1028, 1.442695
    %v1030 = vpow.pop %v1029
    %v1031 = vsel %vm109, %v1030, 0.0
    %1032 = vadd.xlane.f32.xlu0 %v1031
    %v1033 = vpop.xlane.xlu0 %1032
    %v1034 = vrcp.pop %v1033
    %v1035 = vmul.f32 %v1030, %v1034
    %1036 = vrot.lane.b32.xlu0 %v103, 56
    %v1037 = vpop.permute.xlu0 %1036
    %v1040 = vsel %vm109, %v1035, 0
    %1042 = vmatprep.subr.mxu0 0.0
    %1043 = vmatpush1.msra.mxu0 %v1037
    %1044 = vmatprep.subr.mxu0 0.0
    %1045 = vmatpush1.msra.mxu0 0.0
    %1046 = vmatprep.subr.mxu0 0.0
    %1047 = vmatpush1.msra.mxu0 0.0
    %1048 = vmatprep.subr.mxu0 0.0
    %1049 = vmatpush1.msra.mxu0 0.0
    %1050 = vmatprep.subr.mxu0 0.0
    %1051 = vmatpush1.msra.mxu0 0.0
    %1052 = vmatprep.subr.mxu0 0.0
    %1053 = vmatpush1.msra.mxu0 0.0
    %1054 = vmatprep.subr.mxu0 0.0
    %1055 = vmatpush1.msra.mxu0 0.0
    %1056 = vmatprep.subr.mxu0 0.0
    %1057 = vmatpush1.msra.mxu0 0.0
    %1058 = vmatprep.subr.mxu0 0.0
    %1059 = vmatpush1.msra.mxu0 0.0
    %1060 = vmatprep.subr.mxu0 0.0
    %1061 = vmatpush1.msra.mxu0 0.0
    %1062 = vmatprep.subr.mxu0 0.0
    %1063 = vmatpush1.msra.mxu0 0.0
    %1064 = vmatprep.subr.mxu0 0.0
    %1065 = vmatpush1.msra.mxu0 0.0
    %1066 = vmatprep.subr.mxu0 0.0
    %1067 = vmatpush1.msra.mxu0 0.0
    %1068 = vmatprep.subr.mxu0 0.0
    %1069 = vmatpush1.msra.mxu0 0.0
    %1070 = vmatprep.subr.mxu0 0.0
    %1071 = vmatpush1.msra.mxu0 0.0
    %1072 = vmatprep.subr.mxu0 0.0
    %1073 = vmatpush1.msra.mxu0 0.0
    %1074 = vmatprep.subr.mxu0 0.0
    %1075 = vmatpush1.msra.mxu0 0.0
    %1076 = vmatprep.subr.mxu0 0.0
    %1077 = vmatpush1.msra.mxu0 0.0
    %1078 = vmatprep.subr.mxu0 0.0
    %1079 = vmatpush1.msra.mxu0 0.0
    %1080 = vmatprep.subr.mxu0 0.0
    %1081 = vmatpush1.msra.mxu0 0.0
    %1082 = vmatprep.subr.mxu0 0.0
    %1083 = vmatpush1.msra.mxu0 0.0
    %1084 = vmatprep.subr.mxu0 0.0
    %1085 = vmatpush1.msra.mxu0 0.0
    %1086 = vmatprep.subr.mxu0 0.0
    %1087 = vmatpush1.msra.mxu0 0.0
    %1088 = vmatprep.subr.mxu0 0.0
    %1089 = vmatpush1.msra.mxu0 0.0
    %1090 = vmatprep.subr.mxu0 0.0
    %1091 = vmatpush1.msra.mxu0 0.0
    %1092 = vmatprep.subr.mxu0 0.0
    %1093 = vmatpush1.msra.mxu0 0.0
    %1094 = vmatprep.subr.mxu0 0.0
    %1095 = vmatpush1.msra.mxu0 0.0
    %1096 = vmatprep.subr.mxu0 0.0
    %1097 = vmatpush1.msra.mxu0 0.0
    %1098 = vmatprep.subr.mxu0 0.0
    %1099 = vmatpush1.msra.mxu0 0.0
    %1100 = vmatprep.subr.mxu0 0.0
    %1101 = vmatpush1.msra.mxu0 0.0
    %1102 = vmatprep.subr.mxu0 0.0
    %1103 = vmatpush1.msra.mxu0 0.0
    %1104 = vmatprep.subr.mxu0 0.0
    %1105 = vmatpush1.msra.mxu0 0.0
    %1106 = vmatprep.mubr.f32.mxu0 0.0
    %1107 = vmatmul.mubr.f32.gmra.mrb[0].mxu0 %v1040
    %v1108 = vpop.f32.mrb[0].mxu0
    %v1109 = vadd.f32 0.0, %v1108
    %v1110 = vpop.f32.mrb[0].mxu0
    %1111 = vdwg.mxu0
    %1112 = vrot.lane.b32.xlu0 %v103, 112
    %v1113 = vpop.permute.xlu0 %1112
    %1114 = vrot.lane.b32.xlu0 %v103, 80
    %v1115 = vpop.permute.xlu0 %1114
    %v1116 = vsel %vm109, %v1113, 0
    %v1118 = vsel %vm109, %v1115, 0
    %1120 = vmatprep.subr.mxu0 0.0
    %1121 = vmatpush1.xpose.msra.mxu0 %v1118
    %1122 = vmatprep.subr.mxu0 0.0
    %1123 = vmatpush1.xpose.msra.mxu0 0.0
    %1124 = vmatprep.subr.mxu0 0.0
    %1125 = vmatpush1.xpose.msra.mxu0 0.0
    %1126 = vmatprep.subr.mxu0 0.0
    %1127 = vmatpush1.xpose.msra.mxu0 0.0
    %1128 = vmatprep.subr.mxu0 0.0
    %1129 = vmatpush1.xpose.msra.mxu0 0.0
    %1130 = vmatprep.subr.mxu0 0.0
    %1131 = vmatpush1.xpose.msra.mxu0 0.0
    %1132 = vmatprep.subr.mxu0 0.0
    %1133 = vmatpush1.xpose.msra.mxu0 0.0
    %1134 = vmatprep.subr.mxu0 0.0
    %1135 = vmatpush1.xpose.msra.mxu0 0.0
    %1136 = vmatprep.subr.mxu0 0.0
    %1137 = vmatpush1.xpose.msra.mxu0 0.0
    %1138 = vmatprep.subr.mxu0 0.0
    %1139 = vmatpush1.xpose.msra.mxu0 0.0
    %1140 = vmatprep.subr.mxu0 0.0
    %1141 = vmatpush1.xpose.msra.mxu0 0.0
    %1142 = vmatprep.subr.mxu0 0.0
    %1143 = vmatpush1.xpose.msra.mxu0 0.0
    %1144 = vmatprep.subr.mxu0 0.0
    %1145 = vmatpush1.xpose.msra.mxu0 0.0
    %1146 = vmatprep.subr.mxu0 0.0
    %1147 = vmatpush1.xpose.msra.mxu0 0.0
    %1148 = vmatprep.subr.mxu0 0.0
    %1149 = vmatpush1.xpose.msra.mxu0 0.0
    %1150 = vmatprep.subr.mxu0 0.0
    %1151 = vmatpush1.xpose.msra.mxu0 0.0
    %1152 = vmatprep.subr.mxu0 0.0
    %1153 = vmatpush1.xpose.msra.mxu0 0.0
    %1154 = vmatprep.subr.mxu0 0.0
    %1155 = vmatpush1.xpose.msra.mxu0 0.0
    %1156 = vmatprep.subr.mxu0 0.0
    %1157 = vmatpush1.xpose.msra.mxu0 0.0
    %1158 = vmatprep.subr.mxu0 0.0
    %1159 = vmatpush1.xpose.msra.mxu0 0.0
    %1160 = vmatprep.subr.mxu0 0.0
    %1161 = vmatpush1.xpose.msra.mxu0 0.0
    %1162 = vmatprep.subr.mxu0 0.0
    %1163 = vmatpush1.xpose.msra.mxu0 0.0
    %1164 = vmatprep.subr.mxu0 0.0
    %1165 = vmatpush1.xpose.msra.mxu0 0.0
    %1166 = vmatprep.subr.mxu0 0.0
    %1167 = vmatpush1.xpose.msra.mxu0 0.0
    %1168 = vmatprep.subr.mxu0 0.0
    %1169 = vmatpush1.xpose.msra.mxu0 0.0
    %1170 = vmatprep.subr.mxu0 0.0
    %1171 = vmatpush1.xpose.msra.mxu0 0.0
    %1172 = vmatprep.subr.mxu0 0.0
    %1173 = vmatpush1.xpose.msra.mxu0 0.0
    %1174 = vmatprep.subr.mxu0 0.0
    %1175 = vmatpush1.xpose.msra.mxu0 0.0
    %1176 = vmatprep.subr.mxu0 0.0
    %1177 = vmatpush1.xpose.msra.mxu0 0.0
    %1178 = vmatprep.subr.mxu0 0.0
    %1179 = vmatpush1.xpose.msra.mxu0 0.0
    %1180 = vmatprep.subr.mxu0 0.0
    %1181 = vmatpush1.xpose.msra.mxu0 0.0
    %1182 = vmatprep.subr.mxu0 0.0
    %1183 = vmatpush1.xpose.msra.mxu0 0.0
    %1184 = vmatprep.mubr.f32.mxu0 0.0
    %1185 = vmatmul.mubr.f32.gmra.mrb[0].mxu0 %v1116
    %v1186 = vpop.f32.mrb[0].mxu0
    %v1187 = vadd.f32 0.0, %v1186
    %v1188 = vpop.f32.mrb[0].mxu0
    %1189 = vdwg.mxu0
    %v1190 = vsel %vm109, %v1187, -inf
    %1191 = vmax.xlane.f32.xlu0 %v1190
    %v1192 = vpop.xlane.xlu0 %1191
    %v1193 = vsub.f32 %v1187, %v1192
    %v1194 = vmul.f32 %v1193, 1.442695
    %v1195 = vpow.pop %v1194
    %v1196 = vsel %vm109, %v1195, 0.0
    %1197 = vadd.xlane.f32.xlu0 %v1196
    %v1198 = vpop.xlane.xlu0 %1197
    %v1199 = vrcp.pop %v1198
    %v1200 = vmul.f32 %v1195, %v1199
    %1201 = vrot.lane.b32.xlu0 %v103, 48
    %v1202 = vpop.permute.xlu0 %1201
    %v1205 = vsel %vm109, %v1200, 0
    %1207 = vmatprep.subr.mxu0 0.0
    %1208 = vmatpush1.msra.mxu0 %v1202
    %1209 = vmatprep.subr.mxu0 0.0
    %1210 = vmatpush1.msra.mxu0 0.0
    %1211 = vmatprep.subr.mxu0 0.0
    %1212 = vmatpush1.msra.mxu0 0.0
    %1213 = vmatprep.subr.mxu0 0.0
    %1214 = vmatpush1.msra.mxu0 0.0
    %1215 = vmatprep.subr.mxu0 0.0
    %1216 = vmatpush1.msra.mxu0 0.0
    %1217 = vmatprep.subr.mxu0 0.0
    %1218 = vmatpush1.msra.mxu0 0.0
    %1219 = vmatprep.subr.mxu0 0.0
    %1220 = vmatpush1.msra.mxu0 0.0
    %1221 = vmatprep.subr.mxu0 0.0
    %1222 = vmatpush1.msra.mxu0 0.0
    %1223 = vmatprep.subr.mxu0 0.0
    %1224 = vmatpush1.msra.mxu0 0.0
    %1225 = vmatprep.subr.mxu0 0.0
    %1226 = vmatpush1.msra.mxu0 0.0
    %1227 = vmatprep.subr.mxu0 0.0
    %1228 = vmatpush1.msra.mxu0 0.0
    %1229 = vmatprep.subr.mxu0 0.0
    %1230 = vmatpush1.msra.mxu0 0.0
    %1231 = vmatprep.subr.mxu0 0.0
    %1232 = vmatpush1.msra.mxu0 0.0
    %1233 = vmatprep.subr.mxu0 0.0
    %1234 = vmatpush1.msra.mxu0 0.0
    %1235 = vmatprep.subr.mxu0 0.0
    %1236 = vmatpush1.msra.mxu0 0.0
    %1237 = vmatprep.subr.mxu0 0.0
    %1238 = vmatpush1.msra.mxu0 0.0
    %1239 = vmatprep.subr.mxu0 0.0
    %1240 = vmatpush1.msra.mxu0 0.0
    %1241 = vmatprep.subr.mxu0 0.0
    %1242 = vmatpush1.msra.mxu0 0.0
    %1243 = vmatprep.subr.mxu0 0.0
    %1244 = vmatpush1.msra.mxu0 0.0
    %1245 = vmatprep.subr.mxu0 0.0
    %1246 = vmatpush1.msra.mxu0 0.0
    %1247 = vmatprep.subr.mxu0 0.0
    %1248 = vmatpush1.msra.mxu0 0.0
    %1249 = vmatprep.subr.mxu0 0.0
    %1250 = vmatpush1.msra.mxu0 0.0
    %1251 = vmatprep.subr.mxu0 0.0
    %1252 = vmatpush1.msra.mxu0 0.0
    %1253 = vmatprep.subr.mxu0 0.0
    %1254 = vmatpush1.msra.mxu0 0.0
    %1255 = vmatprep.subr.mxu0 0.0
    %1256 = vmatpush1.msra.mxu0 0.0
    %1257 = vmatprep.subr.mxu0 0.0
    %1258 = vmatpush1.msra.mxu0 0.0
    %1259 = vmatprep.subr.mxu0 0.0
    %1260 = vmatpush1.msra.mxu0 0.0
    %1261 = vmatprep.subr.mxu0 0.0
    %1262 = vmatpush1.msra.mxu0 0.0
    %1263 = vmatprep.subr.mxu0 0.0
    %1264 = vmatpush1.msra.mxu0 0.0
    %1265 = vmatprep.subr.mxu0 0.0
    %1266 = vmatpush1.msra.mxu0 0.0
    %1267 = vmatprep.subr.mxu0 0.0
    %1268 = vmatpush1.msra.mxu0 0.0
    %1269 = vmatprep.subr.mxu0 0.0
    %1270 = vmatpush1.msra.mxu0 0.0
    %1271 = vmatprep.mubr.f32.mxu0 0.0
    %1272 = vmatmul.mubr.f32.gmra.mrb[0].mxu0 %v1205
    %v1273 = vpop.f32.mrb[0].mxu0
    %v1274 = vadd.f32 0.0, %v1273
    %v1275 = vpop.f32.mrb[0].mxu0
    %1276 = vdwg.mxu0
    %1277 = vrot.lane.b32.xlu0 %v103, 104
    %v1278 = vpop.permute.xlu0 %1277
    %1279 = vrot.lane.b32.xlu0 %v103, 72
    %v1280 = vpop.permute.xlu0 %1279
    %v1281 = vsel %vm109, %v1278, 0
    %v1283 = vsel %vm109, %v1280, 0
    %1285 = vmatprep.subr.mxu0 0.0
    %1286 = vmatpush1.xpose.msra.mxu0 %v1283
    %1287 = vmatprep.subr.mxu0 0.0
    %1288 = vmatpush1.xpose.msra.mxu0 0.0
    %1289 = vmatprep.subr.mxu0 0.0
    %1290 = vmatpush1.xpose.msra.mxu0 0.0
    %1291 = vmatprep.subr.mxu0 0.0
    %1292 = vmatpush1.xpose.msra.mxu0 0.0
    %1293 = vmatprep.subr.mxu0 0.0
    %1294 = vmatpush1.xpose.msra.mxu0 0.0
    %1295 = vmatprep.subr.mxu0 0.0
    %1296 = vmatpush1.xpose.msra.mxu0 0.0
    %1297 = vmatprep.subr.mxu0 0.0
    %1298 = vmatpush1.xpose.msra.mxu0 0.0
    %1299 = vmatprep.subr.mxu0 0.0
    %1300 = vmatpush1.xpose.msra.mxu0 0.0
    %1301 = vmatprep.subr.mxu0 0.0
    %1302 = vmatpush1.xpose.msra.mxu0 0.0
    %1303 = vmatprep.subr.mxu0 0.0
    %1304 = vmatpush1.xpose.msra.mxu0 0.0
    %1305 = vmatprep.subr.mxu0 0.0
    %1306 = vmatpush1.xpose.msra.mxu0 0.0
    %1307 = vmatprep.subr.mxu0 0.0
    %1308 = vmatpush1.xpose.msra.mxu0 0.0
    %1309 = vmatprep.subr.mxu0 0.0
    %1310 = vmatpush1.xpose.msra.mxu0 0.0
    %1311 = vmatprep.subr.mxu0 0.0
    %1312 = vmatpush1.xpose.msra.mxu0 0.0
    %1313 = vmatprep.subr.mxu0 0.0
    %1314 = vmatpush1.xpose.msra.mxu0 0.0
    %1315 = vmatprep.subr.mxu0 0.0
    %1316 = vmatpush1.xpose.msra.mxu0 0.0
    %1317 = vmatprep.subr.mxu0 0.0
    %1318 = vmatpush1.xpose.msra.mxu0 0.0
    %1319 = vmatprep.subr.mxu0 0.0
    %1320 = vmatpush1.xpose.msra.mxu0 0.0
    %1321 = vmatprep.subr.mxu0 0.0
    %1322 = vmatpush1.xpose.msra.mxu0 0.0
    %1323 = vmatprep.subr.mxu0 0.0
    %1324 = vmatpush1.xpose.msra.mxu0 0.0
    %1325 = vmatprep.subr.mxu0 0.0
    %1326 = vmatpush1.xpose.msra.mxu0 0.0
    %1327 = vmatprep.subr.mxu0 0.0
    %1328 = vmatpush1.xpose.msra.mxu0 0.0
    %1329 = vmatprep.subr.mxu0 0.0
    %1330 = vmatpush1.xpose.msra.mxu0 0.0
    %1331 = vmatprep.subr.mxu0 0.0
    %1332 = vmatpush1.xpose.msra.mxu0 0.0
    %1333 = vmatprep.subr.mxu0 0.0
    %1334 = vmatpush1.xpose.msra.mxu0 0.0
    %1335 = vmatprep.subr.mxu0 0.0
    %1336 = vmatpush1.xpose.msra.mxu0 0.0
    %1337 = vmatprep.subr.mxu0 0.0
    %1338 = vmatpush1.xpose.msra.mxu0 0.0
    %1339 = vmatprep.subr.mxu0 0.0
    %1340 = vmatpush1.xpose.msra.mxu0 0.0
    %1341 = vmatprep.subr.mxu0 0.0
    %1342 = vmatpush1.xpose.msra.mxu0 0.0
    %1343 = vmatprep.subr.mxu0 0.0
    %1344 = vmatpush1.xpose.msra.mxu0 0.0
    %1345 = vmatprep.subr.mxu0 0.0
    %1346 = vmatpush1.xpose.msra.mxu0 0.0
    %1347 = vmatprep.subr.mxu0 0.0
    %1348 = vmatpush1.xpose.msra.mxu0 0.0
    %1349 = vmatprep.mubr.f32.mxu0 0.0
    %1350 = vmatmul.mubr.f32.gmra.mrb[0].mxu0 %v1281
    %v1351 = vpop.f32.mrb[0].mxu0
    %v1352 = vadd.f32 0.0, %v1351
    %v1353 = vpop.f32.mrb[0].mxu0
    %1354 = vdwg.mxu0
    %v1355 = vsel %vm109, %v1352, -inf
    %1356 = vmax.xlane.f32.xlu0 %v1355
    %v1357 = vpop.xlane.xlu0 %1356
    %v1358 = vsub.f32 %v1352, %v1357
    %v1359 = vmul.f32 %v1358, 1.442695
    %v1360 = vpow.pop %v1359
    %v1361 = vsel %vm109, %v1360, 0.0
    %1362 = vadd.xlane.f32.xlu0 %v1361
    %v1363 = vpop.xlane.xlu0 %1362
    %v1364 = vrcp.pop %v1363
    %v1365 = vmul.f32 %v1360, %v1364
    %1366 = vrot.lane.b32.xlu0 %v103, 40
    %v1367 = vpop.permute.xlu0 %1366
    %v1370 = vsel %vm109, %v1365, 0
    %1372 = vmatprep.subr.mxu0 0.0
    %1373 = vmatpush1.msra.mxu0 %v1367
    %1374 = vmatprep.subr.mxu0 0.0
    %1375 = vmatpush1.msra.mxu0 0.0
    %1376 = vmatprep.subr.mxu0 0.0
    %1377 = vmatpush1.msra.mxu0 0.0
    %1378 = vmatprep.subr.mxu0 0.0
    %1379 = vmatpush1.msra.mxu0 0.0
    %1380 = vmatprep.subr.mxu0 0.0
    %1381 = vmatpush1.msra.mxu0 0.0
    %1382 = vmatprep.subr.mxu0 0.0
    %1383 = vmatpush1.msra.mxu0 0.0
    %1384 = vmatprep.subr.mxu0 0.0
    %1385 = vmatpush1.msra.mxu0 0.0
    %1386 = vmatprep.subr.mxu0 0.0
    %1387 = vmatpush1.msra.mxu0 0.0
    %1388 = vmatprep.subr.mxu0 0.0
    %1389 = vmatpush1.msra.mxu0 0.0
    %1390 = vmatprep.subr.mxu0 0.0
    %1391 = vmatpush1.msra.mxu0 0.0
    %1392 = vmatprep.subr.mxu0 0.0
    %1393 = vmatpush1.msra.mxu0 0.0
    %1394 = vmatprep.subr.mxu0 0.0
    %1395 = vmatpush1.msra.mxu0 0.0
    %1396 = vmatprep.subr.mxu0 0.0
    %1397 = vmatpush1.msra.mxu0 0.0
    %1398 = vmatprep.subr.mxu0 0.0
    %1399 = vmatpush1.msra.mxu0 0.0
    %1400 = vmatprep.subr.mxu0 0.0
    %1401 = vmatpush1.msra.mxu0 0.0
    %1402 = vmatprep.subr.mxu0 0.0
    %1403 = vmatpush1.msra.mxu0 0.0
    %1404 = vmatprep.subr.mxu0 0.0
    %1405 = vmatpush1.msra.mxu0 0.0
    %1406 = vmatprep.subr.mxu0 0.0
    %1407 = vmatpush1.msra.mxu0 0.0
    %1408 = vmatprep.subr.mxu0 0.0
    %1409 = vmatpush1.msra.mxu0 0.0
    %1410 = vmatprep.subr.mxu0 0.0
    %1411 = vmatpush1.msra.mxu0 0.0
    %1412 = vmatprep.subr.mxu0 0.0
    %1413 = vmatpush1.msra.mxu0 0.0
    %1414 = vmatprep.subr.mxu0 0.0
    %1415 = vmatpush1.msra.mxu0 0.0
    %1416 = vmatprep.subr.mxu0 0.0
    %1417 = vmatpush1.msra.mxu0 0.0
    %1418 = vmatprep.subr.mxu0 0.0
    %1419 = vmatpush1.msra.mxu0 0.0
    %1420 = vmatprep.subr.mxu0 0.0
    %1421 = vmatpush1.msra.mxu0 0.0
    %1422 = vmatprep.subr.mxu0 0.0
    %1423 = vmatpush1.msra.mxu0 0.0
    %1424 = vmatprep.subr.mxu0 0.0
    %1425 = vmatpush1.msra.mxu0 0.0
    %1426 = vmatprep.subr.mxu0 0.0
    %1427 = vmatpush1.msra.mxu0 0.0
    %1428 = vmatprep.subr.mxu0 0.0
    %1429 = vmatpush1.msra.mxu0 0.0
    %1430 = vmatprep.subr.mxu0 0.0
    %1431 = vmatpush1.msra.mxu0 0.0
    %1432 = vmatprep.subr.mxu0 0.0
    %1433 = vmatpush1.msra.mxu0 0.0
    %1434 = vmatprep.subr.mxu0 0.0
    %1435 = vmatpush1.msra.mxu0 0.0
    %1436 = vmatprep.mubr.f32.mxu0 0.0
    %1437 = vmatmul.mubr.f32.gmra.mrb[0].mxu0 %v1370
    %v1438 = vpop.f32.mrb[0].mxu0
    %v1439 = vadd.f32 0.0, %v1438
    %v1440 = vpop.f32.mrb[0].mxu0
    %1441 = vdwg.mxu0
    %1443 = vrot.lane.b32.xlu0 %v1109, 8
    %v1444 = vpop.permute.xlu0 %1443
    %1447 = vrot.lane.b32.xlu0 %v1274, 16
    %v1448 = vpop.permute.xlu0 %1447
    %1451 = vrot.lane.b32.xlu0 %v1439, 24
    %v1452 = vpop.permute.xlu0 %1451
    %v1454 = vsel %vm109, %v944, %v1444
    %v1455 = vsel %vm779, %v1454, %v1448
    %v1456 = vsel %vm781, %v1455, %v1452
    %v1457 = vpack.c.bf16 %v1456, %v782
    %v1458 = vld [vmem:[%s2] sm:$0xf]
    %v1459 = vld [vmem:[%s2 + $0x4] sm:$0xf]
    %v1460 = vld [vmem:[%s2 + $0x8] sm:$0xf]
    %v1461 = vld [vmem:[%s2 + $0xc] sm:$0xf]
    %v1466 = vunpack.c.l.b16 %v1458
    %v1467 = vunpack.c.l.b16 %v1459
    %v1468 = vunpack.c.l.b16 %v1460
    %v1469 = vunpack.c.l.b16 %v1461
    %v1470 = vpack.c.b16 %v1467, %v1466
    %v1471 = vpack.c.b16 %v1469, %v1468
    %v1475 = vsel %vm61, %v1457, 0
    %1477 = vmatprep.subr.bf16.mxu0 0
    %1478 = vmatpush1.bf16.msra.mxu0 %v1470
    %1479 = vmatprep.subr.bf16.mxu0 0
    %1480 = vmatpush1.bf16.msra.mxu0 %v1471
    %1481 = vmatprep.subr.bf16.mxu0 0
    %1482 = vmatpush1.bf16.msra.mxu0 0
    %1483 = vmatprep.subr.bf16.mxu0 0
    %1484 = vmatpush1.bf16.msra.mxu0 0
    %1485 = vmatprep.subr.bf16.mxu0 0
    %1486 = vmatpush1.bf16.msra.mxu0 0
    %1487 = vmatprep.subr.bf16.mxu0 0
    %1488 = vmatpush1.bf16.msra.mxu0 0
    %1489 = vmatprep.subr.bf16.mxu0 0
    %1490 = vmatpush1.bf16.msra.mxu0 0
    %1491 = vmatprep.subr.bf16.mxu0 0
    %1492 = vmatpush1.bf16.msra.mxu0 0
    %1493 = vmatprep.subr.bf16.mxu0 0
    %1494 = vmatpush1.bf16.msra.mxu0 0
    %1495 = vmatprep.subr.bf16.mxu0 0
    %1496 = vmatpush1.bf16.msra.mxu0 0
    %1497 = vmatprep.subr.bf16.mxu0 0
    %1498 = vmatpush1.bf16.msra.mxu0 0
    %1499 = vmatprep.subr.bf16.mxu0 0
    %1500 = vmatpush1.bf16.msra.mxu0 0
    %1501 = vmatprep.subr.bf16.mxu0 0
    %1502 = vmatpush1.bf16.msra.mxu0 0
    %1503 = vmatprep.subr.bf16.mxu0 0
    %1504 = vmatpush1.bf16.msra.mxu0 0
    %1505 = vmatprep.subr.bf16.mxu0 0
    %1506 = vmatpush1.bf16.msra.mxu0 0
    %1507 = vmatprep.subr.bf16.mxu0 0
    %1508 = vmatpush1.bf16.msra.mxu0 0
    %1509 = vmatprep.mubr.bf16.mxu0 0
    %1510 = vmatmul.mubr.bf16.gmra.mrb[0].mxu0 %v1475
    %v1511 = vpop.f32.mrb[0].mxu0
    %v1512 = vadd.f32 %v42, %v1511
    %v1513 = vpop.f32.mrb[0].mxu0
    %v1514 = vpop.f32.mrb[0].mxu0
    %v1515 = vadd.f32 %v43, %v1514
    %v1516 = vpop.f32.mrb[0].mxu0
    %1517 = vdwg.mxu0
    %v1518 = vpack.c.bf16 %v1515, %v1512
    %v1519 = vld [vmem:[#allocation2] sm:$0xf]
    %v1520 = vld [vmem:[#allocation2 + $0x4] sm:$0xf]
    %v1521 = vld [vmem:[#allocation2 + $0x8] sm:$0xf]
    %v1522 = vld [vmem:[#allocation2 + $0xc] sm:$0xf]
    %v1523 = vld [vmem:[%s4] sm:$0x1]
    %v1525 = vlaneseq
    %v1526 = vshrl.u32 %v1525, 7
    %v1527 = vsub.s32 0, %v1526
    %v1528 = vrot.slane %v1523, %v1527
    %v1534 = vunpack.c.l.b16 %v1519
    %v1535 = vunpack.c.l.b16 %v1520
    %v1536 = vunpack.c.l.b16 %v1521
    %v1537 = vunpack.c.l.b16 %v1522
    %v1538 = vpack.c.b16 %v1535, %v1534
    %v1539 = vpack.c.b16 %v1537, %v1536
    %v1543 = vsel %vm61, %v1518, 0
    %1545 = vmatprep.subr.bf16.mxu0 0
    %1546 = vmatpush1.bf16.msra.mxu0 %v1538
    %1547 = vmatprep.subr.bf16.mxu0 0
    %1548 = vmatpush1.bf16.msra.mxu0 %v1539
    %1549 = vmatprep.subr.bf16.mxu0 0
    %1550 = vmatpush1.bf16.msra.mxu0 0
    %1551 = vmatprep.subr.bf16.mxu0 0
    %1552 = vmatpush1.bf16.msra.mxu0 0
    %1553 = vmatprep.subr.bf16.mxu0 0
    %1554 = vmatpush1.bf16.msra.mxu0 0
    %1555 = vmatprep.subr.bf16.mxu0 0
    %1556 = vmatpush1.bf16.msra.mxu0 0
    %1557 = vmatprep.subr.bf16.mxu0 0
    %1558 = vmatpush1.bf16.msra.mxu0 0
    %1559 = vmatprep.subr.bf16.mxu0 0
    %1560 = vmatpush1.bf16.msra.mxu0 0
    %1561 = vmatprep.subr.bf16.mxu0 0
    %1562 = vmatpush1.bf16.msra.mxu0 0
    %1563 = vmatprep.subr.bf16.mxu0 0
    %1564 = vmatpush1.bf16.msra.mxu0 0
    %1565 = vmatprep.subr.bf16.mxu0 0
    %1566 = vmatpush1.bf16.msra.mxu0 0
    %1567 = vmatprep.subr.bf16.mxu0 0
    %1568 = vmatpush1.bf16.msra.mxu0 0
    %1569 = vmatprep.subr.bf16.mxu0 0
    %1570 = vmatpush1.bf16.msra.mxu0 0
    %1571 = vmatprep.subr.bf16.mxu0 0
    %1572 = vmatpush1.bf16.msra.mxu0 0
    %1573 = vmatprep.subr.bf16.mxu0 0
    %1574 = vmatpush1.bf16.msra.mxu0 0
    %1575 = vmatprep.subr.bf16.mxu0 0
    %1576 = vmatpush1.bf16.msra.mxu0 0
    %1577 = vmatprep.mubr.bf16.mxu0 0
    %1578 = vmatmul.mubr.bf16.gmra.mrb[0].mxu0 %v1543
    %v1579 = vpop.f32.mrb[0].mxu0
    %v1580 = vadd.f32 %v1528, %v1579
    %v1581 = vpop.f32.mrb[0].mxu0
    %v1582 = vpop.f32.mrb[0].mxu0
    %v1583 = vadd.f32 %v1528, %v1582
    %v1584 = vpop.f32.mrb[0].mxu0
    %1585 = vdwg.mxu0
    %v1586 = vmax.f32 %v1580, 0.0
    %v1587 = vmax.f32 %v1583, 0.0
    %v1588 = vpack.c.bf16 %v1587, %v1586
    %v1589 = vld [vmem:[%s5] sm:$0xf]
    %v1590 = vld [vmem:[%s5 + $0x4] sm:$0xf]
    %v1591 = vld [vmem:[%s5 + $0x8] sm:$0xf]
    %v1592 = vld [vmem:[%s5 + $0xc] sm:$0xf]
    %v1593 = vld [vmem:[%s5 + $0x10] sm:$0xf]
    %v1594 = vld [vmem:[%s5 + $0x14] sm:$0xf]
    %v1595 = vld [vmem:[%s5 + $0x18] sm:$0xf]
    %v1596 = vld [vmem:[%s5 + $0x1c] sm:$0xf]
    %v1597 = vld [vmem:[%s6] sm:$0x1]
    %v1599 = vlaneseq
    %v1600 = vshrl.u32 %v1599, 7
    %v1601 = vsub.s32 0, %v1600
    %v1602 = vrot.slane %v1597, %v1601
    %v1612 = vunpack.c.l.b16 %v1589
    %v1613 = vunpack.c.l.b16 %v1590
    %v1614 = vunpack.c.l.b16 %v1591
    %v1615 = vunpack.c.l.b16 %v1592
    %v1616 = vunpack.c.l.b16 %v1593
    %v1617 = vunpack.c.l.b16 %v1594
    %v1618 = vunpack.c.l.b16 %v1595
    %v1619 = vunpack.c.l.b16 %v1596
    %v1620 = vpack.c.b16 %v1613, %v1612
    %v1621 = vpack.c.b16 %v1615, %v1614
    %v1622 = vpack.c.b16 %v1617, %v1616
    %v1623 = vpack.c.b16 %v1619, %v1618
    %vm1628 = vcmask 523264
    %v1630 = vsel %vm1628, %v1588, 0
    %1632 = vmatprep.subr.bf16.mxu0 0
    %1633 = vmatpush1.bf16.msra.mxu0 %v1620
    %1634 = vmatprep.subr.bf16.mxu0 0
    %1635 = vmatpush1.bf16.msra.mxu0 %v1621
    %1636 = vmatprep.subr.bf16.mxu0 0
    %1637 = vmatpush1.bf16.msra.mxu0 %v1622
    %1638 = vmatprep.subr.bf16.mxu0 0
    %1639 = vmatpush1.bf16.msra.mxu0 %v1623
    %1640 = vmatprep.subr.bf16.mxu0 0
    %1641 = vmatpush1.bf16.msra.mxu0 0
    %1642 = vmatprep.subr.bf16.mxu0 0
    %1643 = vmatpush1.bf16.msra.mxu0 0
    %1644 = vmatprep.subr.bf16.mxu0 0
    %1645 = vmatpush1.bf16.msra.mxu0 0
    %1646 = vmatprep.subr.bf16.mxu0 0
    %1647 = vmatpush1.bf16.msra.mxu0 0
    %1648 = vmatprep.subr.bf16.mxu0 0
    %1649 = vmatpush1.bf16.msra.mxu0 0
    %1650 = vmatprep.subr.bf16.mxu0 0
    %1651 = vmatpush1.bf16.msra.mxu0 0
    %1652 = vmatprep.subr.bf16.mxu0 0
    %1653 = vmatpush1.bf16.msra.mxu0 0
    %1654 = vmatprep.subr.bf16.mxu0 0
    %1655 = vmatpush1.bf16.msra.mxu0 0
    %1656 = vmatprep.subr.bf16.mxu0 0
    %1657 = vmatpush1.bf16.msra.mxu0 0
    %1658 = vmatprep.subr.bf16.mxu0 0
    %1659 = vmatpush1.bf16.msra.mxu0 0
    %1660 = vmatprep.subr.bf16.mxu0 0
    %1661 = vmatpush1.bf16.msra.mxu0 0
    %1662 = vmatprep.subr.bf16.mxu0 0
    %1663 = vmatpush1.bf16.msra.mxu0 0
    %1664 = vmatprep.mubr.bf16.mxu0 0
    %1665 = vmatmul.mubr.bf16.gmra.mrb[0].mxu0 %v1630
    %v1666 = vpop.f32.mrb[0].mxu0
    %v1667 = vadd.f32 %v1602, %v1666
    %v1668 = vpop.f32.mrb[0].mxu0
    %v1669 = vpop.f32.mrb[0].mxu0
    %v1670 = vadd.f32 %v1602, %v1669
    %v1671 = vpop.f32.mrb[0].mxu0
    %1672 = vdwg.mxu0
    %v1673 = vadd.f32 %v1667, %v1512
    %v1674 = vadd.f32 %v1670, %v1515
    %1675 = vst.msk [vmem:[#allocation5] sm:$0xff] %vm61, %v1673
    %1676 = vst.msk [vmem:[#allocation5 + $0x8] sm:$0xff] %vm61, %v1674
    // Predicated region
    $region34: #{tpu_custom_call.1} parent=1 // pred_check
      _
    $region35: #{tpu_custom_call.1} parent=1 // pred_check_branch
      %1678 = sbr.rel (0) target = $region37
    $region36: #{tpu_custom_call.1} parent=1 // pred_region
      %s1680 = ssub.s32 256, 256
      %1681 = vsyncadd [#allocation4], %s1680
      %s1682 = sshll.u32 [#allocation5], 4
      %s1683 = int_to_ptr.vmem [resolvable:$true] %s1682
      %1688 = dma.vmem_to_hbm [thread:$0]  %s1683, 256, %s7, [#allocation4], 128, 128, 8
    $region37: #{tpu_custom_call.1} parent=1 // pred_fallthru
      _
    // Predicated region
    $region38: #{tpu_custom_call.1} parent=1 // pred_check
      _
    $region39: #{tpu_custom_call.1} parent=1 // pred_check_branch
      %1690 = sbr.rel (0) target = $region41
    $region40: #{tpu_custom_call.1} parent=1 // pred_region
      %1691 = dma.done [#allocation4], 256
    $region41: #{tpu_custom_call.1} parent=1 // pred_fallthru
      _
    %1692 = vsyncpa [#allocation3], 1
    %1693 = vsyncpa [#allocation4], 1

</llo_original>
